<compile_context>
chip_gen: v6e
topology: v6e:2x2x1
jax: 0.10.0
libtpu: 0.0.40
codegen_flags: <defaults>
</compile_context>

<pallas_src>
import functools

import jax
import jax.numpy as jnp
from jax.experimental import pallas as pl
from jax.experimental.pallas import tpu as pltpu


HP = 128  # padded (lane-dense) hidden width for all layers


# --------------------------------------------------------------------------
# Kernels
# --------------------------------------------------------------------------
def gcn_layer_kernel(a_ref, h_ref, w_ref, b_ref, o_ref):
    """One GCNConv + ReLU for a row-tile:  relu((A_tile @ H) @ W + b)."""
    # (A_tile @ H): bf16 MXU matmul, f32 accumulation.  [tm, F_in]
    ah = jnp.dot(a_ref[...], h_ref[...].astype(jnp.bfloat16),
                 preferred_element_type=jnp.float32)
    # (A_tile @ H) @ W + b : tiny matmul, bf16 operands, f32 accumulate.
    h = jnp.dot(ah.astype(jnp.bfloat16), w_ref[...].astype(jnp.bfloat16),
                preferred_element_type=jnp.float32) + b_ref[...]
    o_ref[...] = jnp.maximum(h, 0.0)


def gcn_final_kernel(a_ref, h_ref, w3_ref, b3_ref, wo_ref, bo_ref, o_ref):
    """conv3 + ReLU + fused Linear(16 -> 1) (padded to 128 lanes)."""
    ah = jnp.dot(a_ref[...], h_ref[...].astype(jnp.bfloat16),
                 preferred_element_type=jnp.float32)
    h3 = jnp.dot(ah.astype(jnp.bfloat16), w3_ref[...].astype(jnp.bfloat16),
                 preferred_element_type=jnp.float32) + b3_ref[...]
    h3 = jnp.maximum(h3, 0.0)
    o_ref[...] = jnp.dot(h3.astype(jnp.bfloat16), wo_ref[...].astype(jnp.bfloat16),
                         preferred_element_type=jnp.float32) + bo_ref[...]


# --------------------------------------------------------------------------
# Glue (plain JAX): dense normalized adjacency + padding helpers
# --------------------------------------------------------------------------
def build_normalized_adjacency(edge_index, num_nodes):
    """Dense Ahat = D^-1/2 (A + I) D^-1/2 (PyG gcn_norm semantics).

    - scatter-ADD so duplicate/parallel edges accumulate (not deduplicate),
    - self-loop (weight 1) added only to nodes that do not already have one
      (matching add_remaining_self_loops instead of blindly adding I).
    """
    src, dst = edge_index[0], edge_index[1]
    a = jnp.zeros((num_nodes, num_nodes), jnp.float32)
    a = a.at[dst, src].add(1.0)                         # message src -> dst
    diag = jnp.diagonal(a)
    a = a + jnp.diag(jnp.where(diag == 0.0, 1.0, 0.0))  # remaining self-loops
    deg = jnp.sum(a, axis=1)
    d_inv_sqrt = jnp.where(deg > 0.0, jax.lax.rsqrt(deg), 0.0)
    return d_inv_sqrt[:, None] * a * d_inv_sqrt[None, :]


def _round_up(x, m):
    return (x + m - 1) // m * m


def _pad_to(arr, shape):
    out = jnp.zeros(shape, arr.dtype)
    return out.at[tuple(slice(0, s) for s in arr.shape)].set(arr)


def _compiler_params():
    return pltpu.CompilerParams(
        dimension_semantics=("parallel",),        # shard row-tiles across TCs (v7x)
        vmem_limit_bytes=48 * 1024 * 1024,        # explicit budget (v7x has 64 MiB)
    )


# --------------------------------------------------------------------------
# Layer wrappers (pallas_call with row-tiled grid)
# --------------------------------------------------------------------------
def _gcn_layer_call(a, h, w, b, *, tm):
    n_pad = a.shape[0]
    f_in = h.shape[1]
    grid = (n_pad // tm,)
    return pl.pallas_call(
        gcn_layer_kernel,
        out_shape=jax.ShapeDtypeStruct((n_pad, HP), jnp.float32),
        grid=grid,
        in_specs=[
            pl.BlockSpec((tm, n_pad), lambda i: (i, 0)),   # A row-tile (bf16)
            pl.BlockSpec((n_pad, f_in), lambda i: (0, 0)), # full H (small)
            pl.BlockSpec((f_in, HP), lambda i: (0, 0)),    # W (padded to 128)
            pl.BlockSpec((1, HP), lambda i: (0, 0)),       # b (padded to 128)
        ],
        out_specs=pl.BlockSpec((tm, HP), lambda i: (i, 0)),
        compiler_params=_compiler_params(),
    )(a, h, w, b)


def _gcn_final_call(a, h, w3, b3, wo, bo, *, tm):
    n_pad = a.shape[0]
    f_in = h.shape[1]
    grid = (n_pad // tm,)
    return pl.pallas_call(
        gcn_final_kernel,
        out_shape=jax.ShapeDtypeStruct((n_pad, HP), jnp.float32),
        grid=grid,
        in_specs=[
            pl.BlockSpec((tm, n_pad), lambda i: (i, 0)),
            pl.BlockSpec((n_pad, f_in), lambda i: (0, 0)),
            pl.BlockSpec((f_in, HP), lambda i: (0, 0)),
            pl.BlockSpec((1, HP), lambda i: (0, 0)),
            pl.BlockSpec((HP, HP), lambda i: (0, 0)),
            pl.BlockSpec((1, HP), lambda i: (0, 0)),
        ],
        out_specs=pl.BlockSpec((tm, HP), lambda i: (i, 0)),
        compiler_params=_compiler_params(),
    )(a, h, w3, b3, wo, bo)


@functools.partial(jax.jit, static_argnames=("tm",))
def gcn_forward(x, edge_index, params, *, tm=128):
    """Forward pass of GCN: 3x (GCNConv + ReLU) + Linear(16, 1)."""
    n, f_in = x.shape
    n_pad = _round_up(n, tm)

    # Dense normalized adjacency, zero-padded and cast to bf16 (only O(N^2) operand).
    a = build_normalized_adjacency(edge_index, n)
    a = _pad_to(a, (n_pad, n_pad)).astype(jnp.bfloat16)

    # Node features: pad rows only (feature dim 8 stays full-extent).
    x_p = _pad_to(x.astype(jnp.float32), (n_pad, f_in))

    (w1, b1, w2, b2, w3, b3, wo, bo) = params
    # Zero-pad all hidden widths to 128 lanes (done once; exact under relu/matmul).
    w1p, b1p = _pad_to(w1, (f_in, HP)), _pad_to(b1, (1, HP))
    w2p, b2p = _pad_to(w2, (HP, HP)), _pad_to(b2, (1, HP))
    w3p, b3p = _pad_to(w3, (HP, HP)), _pad_to(b3, (1, HP))
    wop, bop = _pad_to(wo, (HP, HP)), _pad_to(bo, (1, HP))

    h1 = _gcn_layer_call(a, x_p, w1p, b1p, tm=tm)        # [n_pad, 128]
    h2 = _gcn_layer_call(a, h1, w2p, b2p, tm=tm)         # [n_pad, 128]
    out = _gcn_final_call(a, h2, w3p, b3p, wop, bop, tm=tm)
    return out[:n, :1]                                   # slice padding away


# --------------------------------------------------------------------------
# Params + pure-JAX reference (for a sanity check)
# --------------------------------------------------------------------------
def init_params(key, num_features):
    """Glorot-style init matching GCNConv(F,64) -> (64,32) -> (32,16) -> Linear(16,1)."""
    dims = [(num_features, 64), (64, 32), (32, 16), (16, 1)]
    params = []
    for fi, fo in dims:
        key, kw = jax.random.split(key)
        scale = jnp.sqrt(6.0 / (fi + fo))
        w = jax.random.uniform(kw, (fi, fo), jnp.float32, -scale, scale)
        b = jnp.zeros((1, fo), jnp.float32)
        params.extend([w, b])
    return tuple(params)


def gcn_forward_reference(x, edge_index, params):
    a = build_normalized_adjacency(edge_index, x.shape[0])
    (w1, b1, w2, b2, w3, b3, wo, bo) = params
    h = jnp.maximum(a @ (x @ w1) + b1, 0.0)
    h = jnp.maximum(a @ (h @ w2) + b2, 0.0)
    h = jnp.maximum(a @ (h @ w3) + b3, 0.0)
    return h @ wo + bo


# --------------------------------------------------------------------------
if __name__ == "__main__":
    key = jax.random.PRNGKey(0)

    num_nodes = 16
    num_features = 8

    # Deterministic node features.
    key, kx = jax.random.split(key)
    x = jax.random.normal(kx, (num_nodes, num_features), jnp.float32)

    # Deterministic small graph: bidirectional ring.
    src = jnp.arange(num_nodes, dtype=jnp.int32)
    dst = (src + 1) % num_nodes
    edge_index = jnp.stack([jnp.concatenate([src, dst]),
                            jnp.concatenate([dst, src])], axis=0)  # [2, 2N]

    params = init_params(key, num_features)

    out = gcn_forward(x, edge_index, params)
    out = jax.block_until_ready(out)
    assert out.shape == (num_nodes, 1)

    # Sanity check against a pure-JAX f32 reference (loose tol: A/activations in bf16).
    ref = gcn_forward_reference(x, edge_index, params)
    assert jnp.allclose(out, ref, rtol=5e-2, atol=5e-2), (
        f"max abs err {float(jnp.max(jnp.abs(out - ref)))}")

    print("KERNEL_OK")
</pallas_src>

<mosaic_0001>
module attributes {stable_mosaic.version = 11 : i64} {
  func.func private @main(%arg0: i32) attributes {dimension_semantics = [#tpu.dimension_semantics<core_parallel>], iteration_bounds = array<i64: 2>, tpu.core_type = #tpu.core_type<sc_scalar_subcore>, window_params = []} {
    return
  }
}

module attributes {stable_mosaic.version = 11 : i64} {
  func.func private @main(%arg0: i32) attributes {dimension_semantics = [#tpu.dimension_semantics<core_parallel>], iteration_bounds = array<i64: 2>, tpu.core_type = #tpu.core_type<sc_scalar_subcore>, window_params = []} {
    return
  }
}

module attributes {stable_mosaic.version = 11 : i64} {
  func.func @gcn_layer_kernel(%arg0: i32, %arg1: memref<128x128xbf16, #tpu.memory_space<vmem>>, %arg2: memref<128x128xf32, #tpu.memory_space<vmem>>, %arg3: memref<128x128xf32, #tpu.memory_space<vmem>>, %arg4: memref<1x128xf32, #tpu.memory_space<vmem>>, %arg5: memref<128x128xf32, #tpu.memory_space<vmem>>) attributes {dimension_semantics = [#tpu.dimension_semantics<parallel>], iteration_bounds = array<i64: 1>, scalar_prefetch = 0 : i64, scratch_operands = 0 : i64, tpu.core_type = #tpu.core_type<tc>, window_params = [{transform_indices = @transform_0, window_bounds = array<i64: 128, 128>}, {pipeline_mode = #tpu.pipeline_mode<synchronous>, transform_indices = @transform_1, window_bounds = array<i64: 128, 128>}, {pipeline_mode = #tpu.pipeline_mode<synchronous>, transform_indices = @transform_2, window_bounds = array<i64: 128, 128>}, {pipeline_mode = #tpu.pipeline_mode<synchronous>, transform_indices = @transform_3, window_bounds = array<i64: 1, 128>}, {transform_indices = @transform_4, window_bounds = array<i64: 128, 128>}]} {
    %c0 = arith.constant 0 : index
    %c0_0 = arith.constant 0 : index
    %0 = vector.load %arg1[%c0, %c0_0] : memref<128x128xbf16, #tpu.memory_space<vmem>>, vector<128x128xbf16>
    %c0_1 = arith.constant 0 : index
    %c0_2 = arith.constant 0 : index
    %1 = vector.load %arg2[%c0_1, %c0_2] : memref<128x128xf32, #tpu.memory_space<vmem>>, vector<128x128xf32>
    %2 = arith.truncf %1 : vector<128x128xf32> to vector<128x128xbf16>
    %cst = arith.constant dense<0.000000e+00> : vector<128x128xf32>
    %3 = tpu.matmul %0, %2, %cst {dimension_numbers = #tpu.dot_dimension_numbers<[1], [0], [0], [1], [0, 0, 1, 1], [], []>} : vector<128x128xbf16>, vector<128x128xbf16>, vector<128x128xf32> -> vector<128x128xf32>
    %4 = arith.truncf %3 : vector<128x128xf32> to vector<128x128xbf16>
    %c0_3 = arith.constant 0 : index
    %c0_4 = arith.constant 0 : index
    %5 = vector.load %arg3[%c0_3, %c0_4] : memref<128x128xf32, #tpu.memory_space<vmem>>, vector<128x128xf32>
    %6 = arith.truncf %5 : vector<128x128xf32> to vector<128x128xbf16>
    %cst_5 = arith.constant dense<0.000000e+00> : vector<128x128xf32>
    %7 = tpu.matmul %4, %6, %cst_5 {dimension_numbers = #tpu.dot_dimension_numbers<[1], [0], [0], [1], [0, 0, 1, 1], [], []>} : vector<128x128xbf16>, vector<128x128xbf16>, vector<128x128xf32> -> vector<128x128xf32>
    %c0_6 = arith.constant 0 : index
    %c0_7 = arith.constant 0 : index
    %8 = vector.load %arg4[%c0_6, %c0_7] : memref<1x128xf32, #tpu.memory_space<vmem>>, vector<1x128xf32>
    %9 = vector.broadcast %8 : vector<1x128xf32> to vector<128x128xf32>
    %10 = arith.addf %7, %9 : vector<128x128xf32>
    %cst_8 = arith.constant 0.000000e+00 : f32
    %11 = vector.broadcast %cst_8 : f32 to vector<128x128xf32>
    %12 = arith.maximumf %10, %11 : vector<128x128xf32>
    %c0_9 = arith.constant 0 : index
    %c0_10 = arith.constant 0 : index
    %13 = vector.load %arg5[%c0_9, %c0_10] : memref<128x128xf32, #tpu.memory_space<vmem>>, vector<128x128xf32>
    tpu.vector_store %arg5[%c0_9, %c0_10], %12 {strides = array<i32>} : memref<128x128xf32, #tpu.memory_space<vmem>>, vector<128x128xf32>,
    return
  }
  func.func @transform_0(%arg0: i32) -> (i32, i32) {
    %c0_i32 = arith.constant 0 : i32
    %c0_i32_0 = arith.constant 0 : i32
    return %arg0, %c0_i32 : i32, i32
  }
  func.func @transform_1(%arg0: i32) -> (i32, i32) {
    %c0_i32 = arith.constant 0 : i32
    %c0_i32_0 = arith.constant 0 : i32
    %c0_i32_1 = arith.constant 0 : i32
    return %c0_i32, %c0_i32_0 : i32, i32
  }
  func.func @transform_2(%arg0: i32) -> (i32, i32) {
    %c0_i32 = arith.constant 0 : i32
    %c0_i32_0 = arith.constant 0 : i32
    %c0_i32_1 = arith.constant 0 : i32
    return %c0_i32, %c0_i32_0 : i32, i32
  }
  func.func @transform_3(%arg0: i32) -> (i32, i32) {
    %c0_i32 = arith.constant 0 : i32
    %c0_i32_0 = arith.constant 0 : i32
    %c0_i32_1 = arith.constant 0 : i32
    return %c0_i32, %c0_i32_0 : i32, i32
  }
  func.func @transform_4(%arg0: i32) -> (i32, i32) {
    %c0_i32 = arith.constant 0 : i32
    %c0_i32_0 = arith.constant 0 : i32
    return %arg0, %c0_i32 : i32, i32
  }
}

module attributes {stable_mosaic.version = 11 : i64} {
  func.func @gcn_layer_kernel(%arg0: i32, %arg1: memref<128x128xbf16, #tpu.memory_space<vmem>>, %arg2: memref<128x8xf32, #tpu.memory_space<vmem>>, %arg3: memref<8x128xf32, #tpu.memory_space<vmem>>, %arg4: memref<1x128xf32, #tpu.memory_space<vmem>>, %arg5: memref<128x128xf32, #tpu.memory_space<vmem>>) attributes {dimension_semantics = [#tpu.dimension_semantics<parallel>], iteration_bounds = array<i64: 1>, scalar_prefetch = 0 : i64, scratch_operands = 0 : i64, tpu.core_type = #tpu.core_type<tc>, window_params = [{transform_indices = @transform_0, window_bounds = array<i64: 128, 128>}, {pipeline_mode = #tpu.pipeline_mode<synchronous>, transform_indices = @transform_1, window_bounds = array<i64: 128, 8>}, {pipeline_mode = #tpu.pipeline_mode<synchronous>, transform_indices = @transform_2, window_bounds = array<i64: 8, 128>}, {pipeline_mode = #tpu.pipeline_mode<synchronous>, transform_indices = @transform_3, window_bounds = array<i64: 1, 128>}, {transform_indices = @transform_4, window_bounds = array<i64: 128, 128>}]} {
    %c0 = arith.constant 0 : index
    %c0_0 = arith.constant 0 : index
    %0 = vector.load %arg1[%c0, %c0_0] : memref<128x128xbf16, #tpu.memory_space<vmem>>, vector<128x128xbf16>
    %c0_1 = arith.constant 0 : index
    %c0_2 = arith.constant 0 : index
    %1 = vector.load %arg2[%c0_1, %c0_2] : memref<128x8xf32, #tpu.memory_space<vmem>>, vector<128x8xf32>
    %2 = arith.truncf %1 : vector<128x8xf32> to vector<128x8xbf16>
    %cst = arith.constant dense<0.000000e+00> : vector<128x8xf32>
    %3 = tpu.matmul %0, %2, %cst {dimension_numbers = #tpu.dot_dimension_numbers<[1], [0], [0], [1], [0, 0, 1, 1], [], []>} : vector<128x128xbf16>, vector<128x8xbf16>, vector<128x8xf32> -> vector<128x8xf32>
    %4 = arith.truncf %3 : vector<128x8xf32> to vector<128x8xbf16>
    %c0_3 = arith.constant 0 : index
    %c0_4 = arith.constant 0 : index
    %5 = vector.load %arg3[%c0_3, %c0_4] : memref<8x128xf32, #tpu.memory_space<vmem>>, vector<8x128xf32>
    %6 = arith.truncf %5 : vector<8x128xf32> to vector<8x128xbf16>
    %cst_5 = arith.constant dense<0.000000e+00> : vector<128x128xf32>
    %7 = tpu.matmul %4, %6, %cst_5 {dimension_numbers = #tpu.dot_dimension_numbers<[1], [0], [0], [1], [0, 0, 1, 1], [], []>} : vector<128x8xbf16>, vector<8x128xbf16>, vector<128x128xf32> -> vector<128x128xf32>
    %c0_6 = arith.constant 0 : index
    %c0_7 = arith.constant 0 : index
    %8 = vector.load %arg4[%c0_6, %c0_7] : memref<1x128xf32, #tpu.memory_space<vmem>>, vector<1x128xf32>
    %9 = vector.broadcast %8 : vector<1x128xf32> to vector<128x128xf32>
    %10 = arith.addf %7, %9 : vector<128x128xf32>
    %cst_8 = arith.constant 0.000000e+00 : f32
    %11 = vector.broadcast %cst_8 : f32 to vector<128x128xf32>
    %12 = arith.maximumf %10, %11 : vector<128x128xf32>
    %c0_9 = arith.constant 0 : index
    %c0_10 = arith.constant 0 : index
    %13 = vector.load %arg5[%c0_9, %c0_10] : memref<128x128xf32, #tpu.memory_space<vmem>>, vector<128x128xf32>
    tpu.vector_store %arg5[%c0_9, %c0_10], %12 {strides = array<i32>} : memref<128x128xf32, #tpu.memory_space<vmem>>, vector<128x128xf32>,
    return
  }
  func.func @transform_0(%arg0: i32) -> (i32, i32) {
    %c0_i32 = arith.constant 0 : i32
    %c0_i32_0 = arith.constant 0 : i32
    return %arg0, %c0_i32 : i32, i32
  }
  func.func @transform_1(%arg0: i32) -> (i32, i32) {
    %c0_i32 = arith.constant 0 : i32
    %c0_i32_0 = arith.constant 0 : i32
    %c0_i32_1 = arith.constant 0 : i32
    return %c0_i32, %c0_i32_0 : i32, i32
  }
  func.func @transform_2(%arg0: i32) -> (i32, i32) {
    %c0_i32 = arith.constant 0 : i32
    %c0_i32_0 = arith.constant 0 : i32
    %c0_i32_1 = arith.constant 0 : i32
    return %c0_i32, %c0_i32_0 : i32, i32
  }
  func.func @transform_3(%arg0: i32) -> (i32, i32) {
    %c0_i32 = arith.constant 0 : i32
    %c0_i32_0 = arith.constant 0 : i32
    %c0_i32_1 = arith.constant 0 : i32
    return %c0_i32, %c0_i32_0 : i32, i32
  }
  func.func @transform_4(%arg0: i32) -> (i32, i32) {
    %c0_i32 = arith.constant 0 : i32
    %c0_i32_0 = arith.constant 0 : i32
    return %arg0, %c0_i32 : i32, i32
  }
}

module attributes {stable_mosaic.version = 11 : i64} {
  func.func @gcn_final_kernel(%arg0: i32, %arg1: memref<128x128xbf16, #tpu.memory_space<vmem>>, %arg2: memref<128x128xf32, #tpu.memory_space<vmem>>, %arg3: memref<128x128xf32, #tpu.memory_space<vmem>>, %arg4: memref<1x128xf32, #tpu.memory_space<vmem>>, %arg5: memref<128x128xf32, #tpu.memory_space<vmem>>, %arg6: memref<1x128xf32, #tpu.memory_space<vmem>>, %arg7: memref<128x128xf32, #tpu.memory_space<vmem>>) attributes {dimension_semantics = [#tpu.dimension_semantics<parallel>], iteration_bounds = array<i64: 1>, scalar_prefetch = 0 : i64, scratch_operands = 0 : i64, tpu.core_type = #tpu.core_type<tc>, window_params = [{transform_indices = @transform_0, window_bounds = array<i64: 128, 128>}, {pipeline_mode = #tpu.pipeline_mode<synchronous>, transform_indices = @transform_1, window_bounds = array<i64: 128, 128>}, {pipeline_mode = #tpu.pipeline_mode<synchronous>, transform_indices = @transform_2, window_bounds = array<i64: 128, 128>}, {pipeline_mode = #tpu.pipeline_mode<synchronous>, transform_indices = @transform_3, window_bounds = array<i64: 1, 128>}, {pipeline_mode = #tpu.pipeline_mode<synchronous>, transform_indices = @transform_4, window_bounds = array<i64: 128, 128>}, {pipeline_mode = #tpu.pipeline_mode<synchronous>, transform_indices = @transform_5, window_bounds = array<i64: 1, 128>}, {transform_indices = @transform_6, window_bounds = array<i64: 128, 128>}]} {
    %c0 = arith.constant 0 : index
    %c0_0 = arith.constant 0 : index
    %0 = vector.load %arg1[%c0, %c0_0] : memref<128x128xbf16, #tpu.memory_space<vmem>>, vector<128x128xbf16>
    %c0_1 = arith.constant 0 : index
    %c0_2 = arith.constant 0 : index
    %1 = vector.load %arg2[%c0_1, %c0_2] : memref<128x128xf32, #tpu.memory_space<vmem>>, vector<128x128xf32>
    %2 = arith.truncf %1 : vector<128x128xf32> to vector<128x128xbf16>
    %cst = arith.constant dense<0.000000e+00> : vector<128x128xf32>
    %3 = tpu.matmul %0, %2, %cst {dimension_numbers = #tpu.dot_dimension_numbers<[1], [0], [0], [1], [0, 0, 1, 1], [], []>} : vector<128x128xbf16>, vector<128x128xbf16>, vector<128x128xf32> -> vector<128x128xf32>
    %4 = arith.truncf %3 : vector<128x128xf32> to vector<128x128xbf16>
    %c0_3 = arith.constant 0 : index
    %c0_4 = arith.constant 0 : index
    %5 = vector.load %arg3[%c0_3, %c0_4] : memref<128x128xf32, #tpu.memory_space<vmem>>, vector<128x128xf32>
    %6 = arith.truncf %5 : vector<128x128xf32> to vector<128x128xbf16>
    %cst_5 = arith.constant dense<0.000000e+00> : vector<128x128xf32>
    %7 = tpu.matmul %4, %6, %cst_5 {dimension_numbers = #tpu.dot_dimension_numbers<[1], [0], [0], [1], [0, 0, 1, 1], [], []>} : vector<128x128xbf16>, vector<128x128xbf16>, vector<128x128xf32> -> vector<128x128xf32>
    %c0_6 = arith.constant 0 : index
    %c0_7 = arith.constant 0 : index
    %8 = vector.load %arg4[%c0_6, %c0_7] : memref<1x128xf32, #tpu.memory_space<vmem>>, vector<1x128xf32>
    %9 = vector.broadcast %8 : vector<1x128xf32> to vector<128x128xf32>
    %10 = arith.addf %7, %9 : vector<128x128xf32>
    %cst_8 = arith.constant 0.000000e+00 : f32
    %11 = vector.broadcast %cst_8 : f32 to vector<128x128xf32>
    %12 = arith.maximumf %10, %11 : vector<128x128xf32>
    %13 = arith.truncf %12 : vector<128x128xf32> to vector<128x128xbf16>
    %c0_9 = arith.constant 0 : index
    %c0_10 = arith.constant 0 : index
    %14 = vector.load %arg5[%c0_9, %c0_10] : memref<128x128xf32, #tpu.memory_space<vmem>>, vector<128x128xf32>
    %15 = arith.truncf %14 : vector<128x128xf32> to vector<128x128xbf16>
    %cst_11 = arith.constant dense<0.000000e+00> : vector<128x128xf32>
    %16 = tpu.matmul %13, %15, %cst_11 {dimension_numbers = #tpu.dot_dimension_numbers<[1], [0], [0], [1], [0, 0, 1, 1], [], []>} : vector<128x128xbf16>, vector<128x128xbf16>, vector<128x128xf32> -> vector<128x128xf32>
    %c0_12 = arith.constant 0 : index
    %c0_13 = arith.constant 0 : index
    %17 = vector.load %arg6[%c0_12, %c0_13] : memref<1x128xf32, #tpu.memory_space<vmem>>, vector<1x128xf32>
    %18 = vector.broadcast %17 : vector<1x128xf32> to vector<128x128xf32>
    %19 = arith.addf %16, %18 : vector<128x128xf32>
    %c0_14 = arith.constant 0 : index
    %c0_15 = arith.constant 0 : index
    %20 = vector.load %arg7[%c0_14, %c0_15] : memref<128x128xf32, #tpu.memory_space<vmem>>, vector<128x128xf32>
    tpu.vector_store %arg7[%c0_14, %c0_15], %19 {strides = array<i32>} : memref<128x128xf32, #tpu.memory_space<vmem>>, vector<128x128xf32>,
    return
  }
  func.func @transform_0(%arg0: i32) -> (i32, i32) {
    %c0_i32 = arith.constant 0 : i32
    %c0_i32_0 = arith.constant 0 : i32
    return %arg0, %c0_i32 : i32, i32
  }
  func.func @transform_1(%arg0: i32) -> (i32, i32) {
    %c0_i32 = arith.constant 0 : i32
    %c0_i32_0 = arith.constant 0 : i32
    %c0_i32_1 = arith.constant 0 : i32
    return %c0_i32, %c0_i32_0 : i32, i32
  }
  func.func @transform_2(%arg0: i32) -> (i32, i32) {
    %c0_i32 = arith.constant 0 : i32
    %c0_i32_0 = arith.constant 0 : i32
    %c0_i32_1 = arith.constant 0 : i32
    return %c0_i32, %c0_i32_0 : i32, i32
  }
  func.func @transform_3(%arg0: i32) -> (i32, i32) {
    %c0_i32 = arith.constant 0 : i32
    %c0_i32_0 = arith.constant 0 : i32
    %c0_i32_1 = arith.constant 0 : i32
    return %c0_i32, %c0_i32_0 : i32, i32
  }
  func.func @transform_4(%arg0: i32) -> (i32, i32) {
    %c0_i32 = arith.constant 0 : i32
    %c0_i32_0 = arith.constant 0 : i32
    %c0_i32_1 = arith.constant 0 : i32
    return %c0_i32, %c0_i32_0 : i32, i32
  }
  func.func @transform_5(%arg0: i32) -> (i32, i32) {
    %c0_i32 = arith.constant 0 : i32
    %c0_i32_0 = arith.constant 0 : i32
    %c0_i32_1 = arith.constant 0 : i32
    return %c0_i32, %c0_i32_0 : i32, i32
  }
  func.func @transform_6(%arg0: i32) -> (i32, i32) {
    %c0_i32 = arith.constant 0 : i32
    %c0_i32_0 = arith.constant 0 : i32
    return %arg0, %c0_i32 : i32, i32
  }
}

</mosaic_0001>

<llo_original>
// kernel: gcn_forward.4
$region0: #{gcn_forward.4}
  #allocation0 [shape = 'u32[]', space=smem, size = 0x4, offset = 0x4, fixed_abs, tag = 'smem constant byte address 0x4 - core index']
  #allocation1 [shape = 'u32[144,128]{1,0:T(1,128)}', space=vmem, size = 0x12000, scoped, tag = 'internal scratch']
  %s0 = inlined_call_operand.vmem [shape: bf16[128,128], index: 0, kind: input, shape index: {}]
  %s1 = inlined_call_operand.vmem [shape: f32[128,128], index: 1, kind: input, shape index: {}]
  %s2 = inlined_call_operand.vmem [shape: f32[128,128], index: 2, kind: input, shape index: {}]
  %s3 = inlined_call_operand.vmem [shape: f32[1,128], index: 3, kind: input, shape index: {}]
  %s4 = inlined_call_operand.vmem [shape: f32[128,128], index: 4, kind: output, shape index: {}]
  %s5 = sld [smem:[#allocation0]]
  $region26: #{gcn_forward.4} parent=0
    _
  %s7 = ssub.s32 1, %s5
  %s8 = scalar_select 0, %s7, %s5
  // Predicated region
  $region2: #{gcn_forward.4} parent=0 // pred_check
    _
  $region3: #{gcn_forward.4} parent=0 // pred_check_branch
    %10 = sbr.rel (0) target = $region5
  $region4: #{gcn_forward.4} parent=0 // pred_region
    _
  $region5: #{gcn_forward.4} parent=0 // pred_fallthru
    _
  // Predicated region
  $region6: #{gcn_forward.4} parent=0 // pred_check
    _
  $region7: #{gcn_forward.4} parent=0 // pred_check_branch
    %12 = sbr.rel (0) target = $region9
  $region8: #{gcn_forward.4} parent=0 // pred_region
    _
  $region9: #{gcn_forward.4} parent=0 // pred_fallthru
    _
  // Predicated region
  $region10: #{gcn_forward.4} parent=0 // pred_check
    _
  $region11: #{gcn_forward.4} parent=0 // pred_check_branch
    %14 = sbr.rel (0) target = $region13
  $region12: #{gcn_forward.4} parent=0 // pred_region
    _
  $region13: #{gcn_forward.4} parent=0 // pred_fallthru
    _
  // Predicated region
  $region14: #{gcn_forward.4} parent=0 // pred_check
    _
  $region15: #{gcn_forward.4} parent=0 // pred_check_branch
    %16 = sbr.rel (0) target = $region17
  $region16: #{gcn_forward.4} parent=0 // pred_region
    _
  $region17: #{gcn_forward.4} parent=0 // pred_fallthru
    _
  %v18 = vld [vmem:[%s0] sm:$0xf]
  %v19 = vld [vmem:[%s0 + $0x4] sm:$0xf]
  %v20 = vld [vmem:[%s0 + $0x8] sm:$0xf]
  %v21 = vld [vmem:[%s0 + $0xc] sm:$0xf]
  %v22 = vld [vmem:[%s0 + $0x10] sm:$0xf]
  %v23 = vld [vmem:[%s0 + $0x14] sm:$0xf]
  %v24 = vld [vmem:[%s0 + $0x18] sm:$0xf]
  %v25 = vld [vmem:[%s0 + $0x1c] sm:$0xf]
  %v26 = vld [vmem:[%s0 + $0x20] sm:$0xf]
  %v27 = vld [vmem:[%s0 + $0x24] sm:$0xf]
  %v28 = vld [vmem:[%s0 + $0x28] sm:$0xf]
  %v29 = vld [vmem:[%s0 + $0x2c] sm:$0xf]
  %v30 = vld [vmem:[%s0 + $0x30] sm:$0xf]
  %v31 = vld [vmem:[%s0 + $0x34] sm:$0xf]
  %v32 = vld [vmem:[%s0 + $0x38] sm:$0xf]
  %v33 = vld [vmem:[%s0 + $0x3c] sm:$0xf]
  %v34 = vld [vmem:[%s1] sm:$0xff]
  %v35 = vld [vmem:[%s1 + $0x8] sm:$0xff]
  %v36 = vld [vmem:[%s1 + $0x10] sm:$0xff]
  %v37 = vld [vmem:[%s1 + $0x18] sm:$0xff]
  %v38 = vld [vmem:[%s1 + $0x20] sm:$0xff]
  %v39 = vld [vmem:[%s1 + $0x28] sm:$0xff]
  %v40 = vld [vmem:[%s1 + $0x30] sm:$0xff]
  %v41 = vld [vmem:[%s1 + $0x38] sm:$0xff]
  %v42 = vld [vmem:[%s1 + $0x40] sm:$0xff]
  %v43 = vld [vmem:[%s1 + $0x48] sm:$0xff]
  %v44 = vld [vmem:[%s1 + $0x50] sm:$0xff]
  %v45 = vld [vmem:[%s1 + $0x58] sm:$0xff]
  %v46 = vld [vmem:[%s1 + $0x60] sm:$0xff]
  %v47 = vld [vmem:[%s1 + $0x68] sm:$0xff]
  %v48 = vld [vmem:[%s1 + $0x70] sm:$0xff]
  %v49 = vld [vmem:[%s1 + $0x78] sm:$0xff]
  %v50 = vpack.c.bf16 %v35, %v34
  %v51 = vpack.c.bf16 %v37, %v36
  %v52 = vpack.c.bf16 %v39, %v38
  %v53 = vpack.c.bf16 %v41, %v40
  %v54 = vpack.c.bf16 %v43, %v42
  %v55 = vpack.c.bf16 %v45, %v44
  %v56 = vpack.c.bf16 %v47, %v46
  %v57 = vpack.c.bf16 %v49, %v48
  %v74 = vunpack.c.l.b16 %v18
  %v75 = vunpack.c.l.b16 %v19
  %v76 = vunpack.c.l.b16 %v20
  %v77 = vunpack.c.l.b16 %v21
  %v78 = vunpack.c.l.b16 %v22
  %v79 = vunpack.c.l.b16 %v23
  %v80 = vunpack.c.l.b16 %v24
  %v81 = vunpack.c.l.b16 %v25
  %v82 = vunpack.c.l.b16 %v26
  %v83 = vunpack.c.l.b16 %v27
  %v84 = vunpack.c.l.b16 %v28
  %v85 = vunpack.c.l.b16 %v29
  %v86 = vunpack.c.l.b16 %v30
  %v87 = vunpack.c.l.b16 %v31
  %v88 = vunpack.c.l.b16 %v32
  %v89 = vunpack.c.l.b16 %v33
  %v90 = vpack.c.b16 %v75, %v74
  %v91 = vpack.c.b16 %v77, %v76
  %v92 = vpack.c.b16 %v79, %v78
  %v93 = vpack.c.b16 %v81, %v80
  %v94 = vpack.c.b16 %v83, %v82
  %v95 = vpack.c.b16 %v85, %v84
  %v96 = vpack.c.b16 %v87, %v86
  %v97 = vpack.c.b16 %v89, %v88
  %106 = vmatprep.subr.bf16.mxu0 0
  %107 = vmatpush1.bf16.msra.mxu0 %v57
  %108 = vmatprep.subr.bf16.mxu0 0
  %109 = vmatpush1.bf16.msra.mxu0 %v56
  %110 = vmatprep.subr.bf16.mxu0 0
  %111 = vmatpush1.bf16.msra.mxu0 %v55
  %112 = vmatprep.subr.bf16.mxu0 0
  %113 = vmatpush1.bf16.msra.mxu0 %v54
  %114 = vmatprep.subr.bf16.mxu0 0
  %115 = vmatpush1.bf16.msra.mxu0 %v53
  %116 = vmatprep.subr.bf16.mxu0 0
  %117 = vmatpush1.bf16.msra.mxu0 %v52
  %118 = vmatprep.subr.bf16.mxu0 0
  %119 = vmatpush1.bf16.msra.mxu0 %v51
  %120 = vmatprep.subr.bf16.mxu0 0
  %121 = vmatpush1.bf16.msra.mxu0 %v50
  %122 = vmatprep.subr.bf16.mxu0 0
  %123 = vmatpush2.bf16.msra.mxu0 0
  %124 = vmatprep.subr.bf16.mxu0 0
  %125 = vmatpush2.bf16.msra.mxu0 0
  %126 = vmatprep.subr.bf16.mxu0 0
  %127 = vmatpush2.bf16.msra.mxu0 0
  %128 = vmatprep.subr.bf16.mxu0 0
  %129 = vmatpush2.bf16.msra.mxu0 0
  %130 = vmatprep.subr.bf16.mxu0 0
  %131 = vmatpush2.bf16.msra.mxu0 0
  %132 = vmatprep.subr.bf16.mxu0 0
  %133 = vmatpush2.bf16.msra.mxu0 0
  %134 = vmatprep.subr.bf16.mxu0 0
  %135 = vmatpush2.bf16.msra.mxu0 0
  %136 = vmatprep.subr.bf16.mxu0 0
  %137 = vmatpush2.bf16.msra.mxu0 0
  %138 = vmatprep.mubr.bf16.mxu0 0
  %139 = vmatmul.mubr.bf16.gmra.mxu0 %v90
  %v140 = vpop.f32.mrf.mxu0
  %v141 = vadd.f32 0.0, %v140
  %v142 = vpop.f32.mrf.mxu0
  %v143 = vpop.f32.mrf.mxu0
  %v144 = vadd.f32 0.0, %v143
  %v145 = vpop.f32.mrf.mxu0
  %146 = vmatprep.mubr.bf16.mxu0 0
  %147 = vmatmul.mubr.bf16.gmra.mxu0 %v91
  %v148 = vpop.f32.mrf.mxu0
  %v149 = vadd.f32 0.0, %v148
  %v150 = vpop.f32.mrf.mxu0
  %v151 = vpop.f32.mrf.mxu0
  %v152 = vadd.f32 0.0, %v151
  %v153 = vpop.f32.mrf.mxu0
  %154 = vmatprep.mubr.bf16.mxu0 0
  %155 = vmatmul.mubr.bf16.gmra.mxu0 %v92
  %v156 = vpop.f32.mrf.mxu0
  %v157 = vadd.f32 0.0, %v156
  %v158 = vpop.f32.mrf.mxu0
  %v159 = vpop.f32.mrf.mxu0
  %v160 = vadd.f32 0.0, %v159
  %v161 = vpop.f32.mrf.mxu0
  %162 = vmatprep.mubr.bf16.mxu0 0
  %163 = vmatmul.mubr.bf16.gmra.mxu0 %v93
  %v164 = vpop.f32.mrf.mxu0
  %v165 = vadd.f32 0.0, %v164
  %v166 = vpop.f32.mrf.mxu0
  %v167 = vpop.f32.mrf.mxu0
  %v168 = vadd.f32 0.0, %v167
  %v169 = vpop.f32.mrf.mxu0
  %170 = vmatprep.mubr.bf16.mxu0 0
  %171 = vmatmul.mubr.bf16.gmra.mxu0 %v94
  %v172 = vpop.f32.mrf.mxu0
  %v173 = vadd.f32 0.0, %v172
  %v174 = vpop.f32.mrf.mxu0
  %v175 = vpop.f32.mrf.mxu0
  %v176 = vadd.f32 0.0, %v175
  %v177 = vpop.f32.mrf.mxu0
  %178 = vmatprep.mubr.bf16.mxu0 0
  %179 = vmatmul.mubr.bf16.gmra.mxu0 %v95
  %v180 = vpop.f32.mrf.mxu0
  %v181 = vadd.f32 0.0, %v180
  %v182 = vpop.f32.mrf.mxu0
  %v183 = vpop.f32.mrf.mxu0
  %v184 = vadd.f32 0.0, %v183
  %v185 = vpop.f32.mrf.mxu0
  %186 = vmatprep.mubr.bf16.mxu0 0
  %187 = vmatmul.mubr.bf16.gmra.mxu0 %v96
  %v188 = vpop.f32.mrf.mxu0
  %v189 = vadd.f32 0.0, %v188
  %v190 = vpop.f32.mrf.mxu0
  %v191 = vpop.f32.mrf.mxu0
  %v192 = vadd.f32 0.0, %v191
  %v193 = vpop.f32.mrf.mxu0
  %194 = vmatprep.mubr.bf16.mxu0 0
  %195 = vmatmul.mubr.bf16.gmra.mxu0 %v97
  %v196 = vpop.f32.mrf.mxu0
  %v197 = vadd.f32 0.0, %v196
  %v198 = vpop.f32.mrf.mxu0
  %v199 = vpop.f32.mrf.mxu0
  %v200 = vadd.f32 0.0, %v199
  %v201 = vpop.f32.mrf.mxu0
  %202 = vdwg.mxu0
  %v203 = vpack.c.bf16 %v144, %v141
  %v204 = vpack.c.bf16 %v152, %v149
  %v205 = vpack.c.bf16 %v160, %v157
  %v206 = vpack.c.bf16 %v168, %v165
  %v207 = vpack.c.bf16 %v176, %v173
  %v208 = vpack.c.bf16 %v184, %v181
  %v209 = vpack.c.bf16 %v192, %v189
  %v210 = vpack.c.bf16 %v200, %v197
  %v211 = vld [vmem:[%s2] sm:$0xff]
  %v212 = vld [vmem:[%s2 + $0x8] sm:$0xff]
  %v213 = vld [vmem:[%s2 + $0x10] sm:$0xff]
  %v214 = vld [vmem:[%s2 + $0x18] sm:$0xff]
  %v215 = vld [vmem:[%s2 + $0x20] sm:$0xff]
  %v216 = vld [vmem:[%s2 + $0x28] sm:$0xff]
  %v217 = vld [vmem:[%s2 + $0x30] sm:$0xff]
  %v218 = vld [vmem:[%s2 + $0x38] sm:$0xff]
  %v219 = vld [vmem:[%s2 + $0x40] sm:$0xff]
  %v220 = vld [vmem:[%s2 + $0x48] sm:$0xff]
  %v221 = vld [vmem:[%s2 + $0x50] sm:$0xff]
  %v222 = vld [vmem:[%s2 + $0x58] sm:$0xff]
  %v223 = vld [vmem:[%s2 + $0x60] sm:$0xff]
  %v224 = vld [vmem:[%s2 + $0x68] sm:$0xff]
  %v225 = vld [vmem:[%s2 + $0x70] sm:$0xff]
  %v226 = vld [vmem:[%s2 + $0x78] sm:$0xff]
  %v227 = vpack.c.bf16 %v212, %v211
  %v228 = vpack.c.bf16 %v214, %v213
  %v229 = vpack.c.bf16 %v216, %v215
  %v230 = vpack.c.bf16 %v218, %v217
  %v231 = vpack.c.bf16 %v220, %v219
  %v232 = vpack.c.bf16 %v222, %v221
  %v233 = vpack.c.bf16 %v224, %v223
  %v234 = vpack.c.bf16 %v226, %v225
  %v235 = vld [vmem:[%s3] sm:$0x1]
  %v237 = vlaneseq
  %v238 = vshrl.u32 %v237, 7
  %v239 = vsub.s32 0, %v238
  %v240 = vrot.slane %v235, %v239
  %242 = vmatprep.subr.bf16.mxu0 0
  %243 = vmatpush1.bf16.msra.mxu0 %v234
  %244 = vmatprep.subr.bf16.mxu0 0
  %245 = vmatpush1.bf16.msra.mxu0 %v233
  %246 = vmatprep.subr.bf16.mxu0 0
  %247 = vmatpush1.bf16.msra.mxu0 %v232
  %248 = vmatprep.subr.bf16.mxu0 0
  %249 = vmatpush1.bf16.msra.mxu0 %v231
  %250 = vmatprep.subr.bf16.mxu0 0
  %251 = vmatpush1.bf16.msra.mxu0 %v230
  %252 = vmatprep.subr.bf16.mxu0 0
  %253 = vmatpush1.bf16.msra.mxu0 %v229
  %254 = vmatprep.subr.bf16.mxu0 0
  %255 = vmatpush1.bf16.msra.mxu0 %v228
  %256 = vmatprep.subr.bf16.mxu0 0
  %257 = vmatpush1.bf16.msra.mxu0 %v227
  %258 = vmatprep.subr.bf16.mxu0 0
  %259 = vmatpush2.bf16.msra.mxu0 0
  %260 = vmatprep.subr.bf16.mxu0 0
  %261 = vmatpush2.bf16.msra.mxu0 0
  %262 = vmatprep.subr.bf16.mxu0 0
  %263 = vmatpush2.bf16.msra.mxu0 0
  %264 = vmatprep.subr.bf16.mxu0 0
  %265 = vmatpush2.bf16.msra.mxu0 0
  %266 = vmatprep.subr.bf16.mxu0 0
  %267 = vmatpush2.bf16.msra.mxu0 0
  %268 = vmatprep.subr.bf16.mxu0 0
  %269 = vmatpush2.bf16.msra.mxu0 0
  %270 = vmatprep.subr.bf16.mxu0 0
  %271 = vmatpush2.bf16.msra.mxu0 0
  %272 = vmatprep.subr.bf16.mxu0 0
  %273 = vmatpush2.bf16.msra.mxu0 0
  %274 = vmatprep.mubr.bf16.mxu0 0
  %275 = vmatmul.mubr.bf16.gmra.mxu0 %v203
  %v276 = vpop.f32.mrf.mxu0
  %v277 = vadd.f32 %v240, %v276
  %v278 = vpop.f32.mrf.mxu0
  %v279 = vpop.f32.mrf.mxu0
  %v280 = vadd.f32 %v240, %v279
  %v281 = vpop.f32.mrf.mxu0
  %282 = vmatprep.mubr.bf16.mxu0 0
  %283 = vmatmul.mubr.bf16.gmra.mxu0 %v204
  %v284 = vpop.f32.mrf.mxu0
  %v285 = vadd.f32 %v240, %v284
  %v286 = vpop.f32.mrf.mxu0
  %v287 = vpop.f32.mrf.mxu0
  %v288 = vadd.f32 %v240, %v287
  %v289 = vpop.f32.mrf.mxu0
  %290 = vmatprep.mubr.bf16.mxu0 0
  %291 = vmatmul.mubr.bf16.gmra.mxu0 %v205
  %v292 = vpop.f32.mrf.mxu0
  %v293 = vadd.f32 %v240, %v292
  %v294 = vpop.f32.mrf.mxu0
  %v295 = vpop.f32.mrf.mxu0
  %v296 = vadd.f32 %v240, %v295
  %v297 = vpop.f32.mrf.mxu0
  %298 = vmatprep.mubr.bf16.mxu0 0
  %299 = vmatmul.mubr.bf16.gmra.mxu0 %v206
  %v300 = vpop.f32.mrf.mxu0
  %v301 = vadd.f32 %v240, %v300
  %v302 = vpop.f32.mrf.mxu0
  %v303 = vpop.f32.mrf.mxu0
  %v304 = vadd.f32 %v240, %v303
  %v305 = vpop.f32.mrf.mxu0
  %306 = vmatprep.mubr.bf16.mxu0 0
  %307 = vmatmul.mubr.bf16.gmra.mxu0 %v207
  %v308 = vpop.f32.mrf.mxu0
  %v309 = vadd.f32 %v240, %v308
  %v310 = vpop.f32.mrf.mxu0
  %v311 = vpop.f32.mrf.mxu0
  %v312 = vadd.f32 %v240, %v311
  %v313 = vpop.f32.mrf.mxu0
  %314 = vmatprep.mubr.bf16.mxu0 0
  %315 = vmatmul.mubr.bf16.gmra.mxu0 %v208
  %v316 = vpop.f32.mrf.mxu0
  %v317 = vadd.f32 %v240, %v316
  %v318 = vpop.f32.mrf.mxu0
  %v319 = vpop.f32.mrf.mxu0
  %v320 = vadd.f32 %v240, %v319
  %v321 = vpop.f32.mrf.mxu0
  %322 = vmatprep.mubr.bf16.mxu0 0
  %323 = vmatmul.mubr.bf16.gmra.mxu0 %v209
  %v324 = vpop.f32.mrf.mxu0
  %v325 = vadd.f32 %v240, %v324
  %v326 = vpop.f32.mrf.mxu0
  %v327 = vpop.f32.mrf.mxu0
  %v328 = vadd.f32 %v240, %v327
  %v329 = vpop.f32.mrf.mxu0
  %330 = vmatprep.mubr.bf16.mxu0 0
  %331 = vmatmul.mubr.bf16.gmra.mxu0 %v210
  %v332 = vpop.f32.mrf.mxu0
  %v333 = vadd.f32 %v240, %v332
  %v334 = vpop.f32.mrf.mxu0
  %v335 = vpop.f32.mrf.mxu0
  %v336 = vadd.f32 %v240, %v335
  %v337 = vpop.f32.mrf.mxu0
  %338 = vdwg.mxu0
  %v339 = vmax.f32 %v277, 0.0
  %v340 = vmax.f32 %v280, 0.0
  %v341 = vmax.f32 %v285, 0.0
  %v342 = vmax.f32 %v288, 0.0
  %v343 = vmax.f32 %v293, 0.0
  %v344 = vmax.f32 %v296, 0.0
  %v345 = vmax.f32 %v301, 0.0
  %v346 = vmax.f32 %v304, 0.0
  %v347 = vmax.f32 %v309, 0.0
  %v348 = vmax.f32 %v312, 0.0
  %v349 = vmax.f32 %v317, 0.0
  %v350 = vmax.f32 %v320, 0.0
  %v351 = vmax.f32 %v325, 0.0
  %v352 = vmax.f32 %v328, 0.0
  %v353 = vmax.f32 %v333, 0.0
  %v354 = vmax.f32 %v336, 0.0
  %355 = vst [vmem:[%s4] sm:$0xff] %v339
  %356 = vst [vmem:[%s4 + $0x8] sm:$0xff] %v340
  %357 = vst [vmem:[%s4 + $0x10] sm:$0xff] %v341
  %358 = vst [vmem:[%s4 + $0x18] sm:$0xff] %v342
  %359 = vst [vmem:[%s4 + $0x20] sm:$0xff] %v343
  %360 = vst [vmem:[%s4 + $0x28] sm:$0xff] %v344
  %361 = vst [vmem:[%s4 + $0x30] sm:$0xff] %v345
  %362 = vst [vmem:[%s4 + $0x38] sm:$0xff] %v346
  %363 = vst [vmem:[%s4 + $0x40] sm:$0xff] %v347
  %364 = vst [vmem:[%s4 + $0x48] sm:$0xff] %v348
  %365 = vst [vmem:[%s4 + $0x50] sm:$0xff] %v349
  %366 = vst [vmem:[%s4 + $0x58] sm:$0xff] %v350
  %367 = vst [vmem:[%s4 + $0x60] sm:$0xff] %v351
  %368 = vst [vmem:[%s4 + $0x68] sm:$0xff] %v352
  %369 = vst [vmem:[%s4 + $0x70] sm:$0xff] %v353
  %370 = vst [vmem:[%s4 + $0x78] sm:$0xff] %v354
  // Predicated region
  $region18: #{gcn_forward.4} parent=0 // pred_check
    _
  $region19: #{gcn_forward.4} parent=0 // pred_check_branch
    %372 = sbr.rel (0) target = $region21
  $region20: #{gcn_forward.4} parent=0 // pred_region
    _
  $region21: #{gcn_forward.4} parent=0 // pred_fallthru
    _
  // Predicated region
  $region22: #{gcn_forward.4} parent=0 // pred_check
    _
  $region23: #{gcn_forward.4} parent=0 // pred_check_branch
    %374 = sbr.rel (0) target = $region25
  $region24: #{gcn_forward.4} parent=0 // pred_region
    _
  $region25: #{gcn_forward.4} parent=0 // pred_fallthru
    _

// kernel: gcn_forward.3
$region0: #{gcn_forward.3}
  #allocation0 [shape = 'u32[]', space=smem, size = 0x4, offset = 0x4, fixed_abs, tag = 'smem constant byte address 0x4 - core index']
  #allocation1 [shape = 'u32[144,128]{1,0:T(1,128)}', space=vmem, size = 0x12000, scoped, tag = 'internal scratch']
  %s0 = inlined_call_operand.vmem [shape: bf16[128,128], index: 0, kind: input, shape index: {}]
  %s1 = inlined_call_operand.vmem [shape: f32[128,8], index: 1, kind: input, shape index: {}]
  %s2 = inlined_call_operand.vmem [shape: f32[8,128], index: 2, kind: input, shape index: {}]
  %s3 = inlined_call_operand.vmem [shape: f32[1,128], index: 3, kind: input, shape index: {}]
  %s4 = inlined_call_operand.vmem [shape: f32[128,128], index: 4, kind: output, shape index: {}]
  %s5 = sld [smem:[#allocation0]]
  $region26: #{gcn_forward.3} parent=0
    _
  %s7 = ssub.s32 1, %s5
  %s8 = scalar_select 0, %s7, %s5
  // Predicated region
  $region2: #{gcn_forward.3} parent=0 // pred_check
    _
  $region3: #{gcn_forward.3} parent=0 // pred_check_branch
    %10 = sbr.rel (0) target = $region5
  $region4: #{gcn_forward.3} parent=0 // pred_region
    _
  $region5: #{gcn_forward.3} parent=0 // pred_fallthru
    _
  // Predicated region
  $region6: #{gcn_forward.3} parent=0 // pred_check
    _
  $region7: #{gcn_forward.3} parent=0 // pred_check_branch
    %12 = sbr.rel (0) target = $region9
  $region8: #{gcn_forward.3} parent=0 // pred_region
    _
  $region9: #{gcn_forward.3} parent=0 // pred_fallthru
    _
  // Predicated region
  $region10: #{gcn_forward.3} parent=0 // pred_check
    _
  $region11: #{gcn_forward.3} parent=0 // pred_check_branch
    %14 = sbr.rel (0) target = $region13
  $region12: #{gcn_forward.3} parent=0 // pred_region
    _
  $region13: #{gcn_forward.3} parent=0 // pred_fallthru
    _
  // Predicated region
  $region14: #{gcn_forward.3} parent=0 // pred_check
    _
  $region15: #{gcn_forward.3} parent=0 // pred_check_branch
    %16 = sbr.rel (0) target = $region17
  $region16: #{gcn_forward.3} parent=0 // pred_region
    _
  $region17: #{gcn_forward.3} parent=0 // pred_fallthru
    _
  %v18 = vld [vmem:[%s0] sm:$0xf]
  %v19 = vld [vmem:[%s0 + $0x4] sm:$0xf]
  %v20 = vld [vmem:[%s0 + $0x8] sm:$0xf]
  %v21 = vld [vmem:[%s0 + $0xc] sm:$0xf]
  %v22 = vld [vmem:[%s0 + $0x10] sm:$0xf]
  %v23 = vld [vmem:[%s0 + $0x14] sm:$0xf]
  %v24 = vld [vmem:[%s0 + $0x18] sm:$0xf]
  %v25 = vld [vmem:[%s0 + $0x1c] sm:$0xf]
  %v26 = vld [vmem:[%s0 + $0x20] sm:$0xf]
  %v27 = vld [vmem:[%s0 + $0x24] sm:$0xf]
  %v28 = vld [vmem:[%s0 + $0x28] sm:$0xf]
  %v29 = vld [vmem:[%s0 + $0x2c] sm:$0xf]
  %v30 = vld [vmem:[%s0 + $0x30] sm:$0xf]
  %v31 = vld [vmem:[%s0 + $0x34] sm:$0xf]
  %v32 = vld [vmem:[%s0 + $0x38] sm:$0xf]
  %v33 = vld [vmem:[%s0 + $0x3c] sm:$0xf]
  %v34 = vld [vmem:[%s1] sm:$0xff]
  %v35 = vld [vmem:[%s1 + $0x8] sm:$0xff]
  %v36 = vld [vmem:[%s1 + $0x10] sm:$0xff]
  %v37 = vld [vmem:[%s1 + $0x18] sm:$0xff]
  %v38 = vld [vmem:[%s1 + $0x20] sm:$0xff]
  %v39 = vld [vmem:[%s1 + $0x28] sm:$0xff]
  %v40 = vld [vmem:[%s1 + $0x30] sm:$0xff]
  %v41 = vld [vmem:[%s1 + $0x38] sm:$0xff]
  %v42 = vld [vmem:[%s1 + $0x40] sm:$0xff]
  %v43 = vld [vmem:[%s1 + $0x48] sm:$0xff]
  %v44 = vld [vmem:[%s1 + $0x50] sm:$0xff]
  %v45 = vld [vmem:[%s1 + $0x58] sm:$0xff]
  %v46 = vld [vmem:[%s1 + $0x60] sm:$0xff]
  %v47 = vld [vmem:[%s1 + $0x68] sm:$0xff]
  %v48 = vld [vmem:[%s1 + $0x70] sm:$0xff]
  %v49 = vld [vmem:[%s1 + $0x78] sm:$0xff]
  %v50 = vpack.c.bf16 %v35, %v34
  %v51 = vpack.c.bf16 %v37, %v36
  %v52 = vpack.c.bf16 %v39, %v38
  %v53 = vpack.c.bf16 %v41, %v40
  %v54 = vpack.c.bf16 %v43, %v42
  %v55 = vpack.c.bf16 %v45, %v44
  %v56 = vpack.c.bf16 %v47, %v46
  %v57 = vpack.c.bf16 %v49, %v48
  %v74 = vunpack.c.l.b16 %v18
  %v75 = vunpack.c.l.b16 %v19
  %v76 = vunpack.c.l.b16 %v20
  %v77 = vunpack.c.l.b16 %v21
  %v78 = vunpack.c.l.b16 %v22
  %v79 = vunpack.c.l.b16 %v23
  %v80 = vunpack.c.l.b16 %v24
  %v81 = vunpack.c.l.b16 %v25
  %v82 = vunpack.c.l.b16 %v26
  %v83 = vunpack.c.l.b16 %v27
  %v84 = vunpack.c.l.b16 %v28
  %v85 = vunpack.c.l.b16 %v29
  %v86 = vunpack.c.l.b16 %v30
  %v87 = vunpack.c.l.b16 %v31
  %v88 = vunpack.c.l.b16 %v32
  %v89 = vunpack.c.l.b16 %v33
  %v90 = vpack.c.b16 %v75, %v74
  %v91 = vpack.c.b16 %v77, %v76
  %v92 = vpack.c.b16 %v79, %v78
  %v93 = vpack.c.b16 %v81, %v80
  %v94 = vpack.c.b16 %v83, %v82
  %v95 = vpack.c.b16 %v85, %v84
  %v96 = vpack.c.b16 %v87, %v86
  %v97 = vpack.c.b16 %v89, %v88
  %106 = vmatprep.subr.bf16.mxu0 0
  %107 = vmatpush1.bf16.msra.mxu0 %v57
  %108 = vmatprep.subr.bf16.mxu0 0
  %109 = vmatpush1.bf16.msra.mxu0 %v56
  %110 = vmatprep.subr.bf16.mxu0 0
  %111 = vmatpush1.bf16.msra.mxu0 %v55
  %112 = vmatprep.subr.bf16.mxu0 0
  %113 = vmatpush1.bf16.msra.mxu0 %v54
  %114 = vmatprep.subr.bf16.mxu0 0
  %115 = vmatpush1.bf16.msra.mxu0 %v53
  %116 = vmatprep.subr.bf16.mxu0 0
  %117 = vmatpush1.bf16.msra.mxu0 %v52
  %118 = vmatprep.subr.bf16.mxu0 0
  %119 = vmatpush1.bf16.msra.mxu0 %v51
  %120 = vmatprep.subr.bf16.mxu0 0
  %121 = vmatpush1.bf16.msra.mxu0 %v50
  %122 = vmatprep.subr.bf16.mxu0 0
  %123 = vmatpush2.bf16.msra.mxu0 0
  %124 = vmatprep.subr.bf16.mxu0 0
  %125 = vmatpush2.bf16.msra.mxu0 0
  %126 = vmatprep.subr.bf16.mxu0 0
  %127 = vmatpush2.bf16.msra.mxu0 0
  %128 = vmatprep.subr.bf16.mxu0 0
  %129 = vmatpush2.bf16.msra.mxu0 0
  %130 = vmatprep.subr.bf16.mxu0 0
  %131 = vmatpush2.bf16.msra.mxu0 0
  %132 = vmatprep.subr.bf16.mxu0 0
  %133 = vmatpush2.bf16.msra.mxu0 0
  %134 = vmatprep.subr.bf16.mxu0 0
  %135 = vmatpush2.bf16.msra.mxu0 0
  %136 = vmatprep.subr.bf16.mxu0 0
  %137 = vmatpush2.bf16.msra.mxu0 0
  %138 = vmatprep.mubr.bf16.mxu0 0
  %139 = vmatmul.mubr.bf16.gmra.mxu0 %v90
  %v140 = vpop.f32.mrf.mxu0
  %v141 = vadd.f32 0.0, %v140
  %v142 = vpop.f32.mrf.mxu0
  %v143 = vpop.f32.mrf.mxu0
  %v144 = vadd.f32 0.0, %v143
  %v145 = vpop.f32.mrf.mxu0
  %146 = vmatprep.mubr.bf16.mxu0 0
  %147 = vmatmul.mubr.bf16.gmra.mxu0 %v91
  %v148 = vpop.f32.mrf.mxu0
  %v149 = vadd.f32 0.0, %v148
  %v150 = vpop.f32.mrf.mxu0
  %v151 = vpop.f32.mrf.mxu0
  %v152 = vadd.f32 0.0, %v151
  %v153 = vpop.f32.mrf.mxu0
  %154 = vmatprep.mubr.bf16.mxu0 0
  %155 = vmatmul.mubr.bf16.gmra.mxu0 %v92
  %v156 = vpop.f32.mrf.mxu0
  %v157 = vadd.f32 0.0, %v156
  %v158 = vpop.f32.mrf.mxu0
  %v159 = vpop.f32.mrf.mxu0
  %v160 = vadd.f32 0.0, %v159
  %v161 = vpop.f32.mrf.mxu0
  %162 = vmatprep.mubr.bf16.mxu0 0
  %163 = vmatmul.mubr.bf16.gmra.mxu0 %v93
  %v164 = vpop.f32.mrf.mxu0
  %v165 = vadd.f32 0.0, %v164
  %v166 = vpop.f32.mrf.mxu0
  %v167 = vpop.f32.mrf.mxu0
  %v168 = vadd.f32 0.0, %v167
  %v169 = vpop.f32.mrf.mxu0
  %170 = vmatprep.mubr.bf16.mxu0 0
  %171 = vmatmul.mubr.bf16.gmra.mxu0 %v94
  %v172 = vpop.f32.mrf.mxu0
  %v173 = vadd.f32 0.0, %v172
  %v174 = vpop.f32.mrf.mxu0
  %v175 = vpop.f32.mrf.mxu0
  %v176 = vadd.f32 0.0, %v175
  %v177 = vpop.f32.mrf.mxu0
  %178 = vmatprep.mubr.bf16.mxu0 0
  %179 = vmatmul.mubr.bf16.gmra.mxu0 %v95
  %v180 = vpop.f32.mrf.mxu0
  %v181 = vadd.f32 0.0, %v180
  %v182 = vpop.f32.mrf.mxu0
  %v183 = vpop.f32.mrf.mxu0
  %v184 = vadd.f32 0.0, %v183
  %v185 = vpop.f32.mrf.mxu0
  %186 = vmatprep.mubr.bf16.mxu0 0
  %187 = vmatmul.mubr.bf16.gmra.mxu0 %v96
  %v188 = vpop.f32.mrf.mxu0
  %v189 = vadd.f32 0.0, %v188
  %v190 = vpop.f32.mrf.mxu0
  %v191 = vpop.f32.mrf.mxu0
  %v192 = vadd.f32 0.0, %v191
  %v193 = vpop.f32.mrf.mxu0
  %194 = vmatprep.mubr.bf16.mxu0 0
  %195 = vmatmul.mubr.bf16.gmra.mxu0 %v97
  %v196 = vpop.f32.mrf.mxu0
  %v197 = vadd.f32 0.0, %v196
  %v198 = vpop.f32.mrf.mxu0
  %v199 = vpop.f32.mrf.mxu0
  %v200 = vadd.f32 0.0, %v199
  %v201 = vpop.f32.mrf.mxu0
  %202 = vdwg.mxu0
  %v203 = vpack.c.bf16 %v144, %v141
  %v204 = vpack.c.bf16 %v152, %v149
  %v205 = vpack.c.bf16 %v160, %v157
  %v206 = vpack.c.bf16 %v168, %v165
  %v207 = vpack.c.bf16 %v176, %v173
  %v208 = vpack.c.bf16 %v184, %v181
  %v209 = vpack.c.bf16 %v192, %v189
  %v210 = vpack.c.bf16 %v200, %v197
  %v211 = vld [vmem:[%s2] sm:$0xff]
  %v212 = vpack.c.bf16 %v211, %v211
  %v213 = vld [vmem:[%s3] sm:$0x1]
  %v215 = vlaneseq
  %v216 = vshrl.u32 %v215, 7
  %v217 = vsub.s32 0, %v216
  %v218 = vrot.slane %v213, %v217
  %vm220 = vcmask 64512
  %v222 = vsel %vm220, %v203, 0
  %v225 = vsel %vm220, %v204, 0
  %v228 = vsel %vm220, %v205, 0
  %v231 = vsel %vm220, %v206, 0
  %v234 = vsel %vm220, %v207, 0
  %v237 = vsel %vm220, %v208, 0
  %v240 = vsel %vm220, %v209, 0
  %v243 = vsel %vm220, %v210, 0
  %vm245 = vcmask 1043456
  %v247 = vsel %vm245, %v212, 0
  %249 = vmatprep.subr.bf16.mxu0 0
  %250 = vmatpush1.bf16.msra.mxu0 0
  %251 = vmatprep.subr.bf16.mxu0 0
  %252 = vmatpush1.bf16.msra.mxu0 0
  %253 = vmatprep.subr.bf16.mxu0 0
  %254 = vmatpush1.bf16.msra.mxu0 0
  %255 = vmatprep.subr.bf16.mxu0 0
  %256 = vmatpush1.bf16.msra.mxu0 0
  %257 = vmatprep.subr.bf16.mxu0 0
  %258 = vmatpush1.bf16.msra.mxu0 0
  %259 = vmatprep.subr.bf16.mxu0 0
  %260 = vmatpush1.bf16.msra.mxu0 0
  %261 = vmatprep.subr.bf16.mxu0 0
  %262 = vmatpush1.bf16.msra.mxu0 0
  %263 = vmatprep.subr.bf16.mxu0 0
  %264 = vmatpush1.bf16.msra.mxu0 %v247
  %265 = vmatprep.subr.bf16.mxu0 0
  %266 = vmatpush2.bf16.msra.mxu0 0
  %267 = vmatprep.subr.bf16.mxu0 0
  %268 = vmatpush2.bf16.msra.mxu0 0
  %269 = vmatprep.subr.bf16.mxu0 0
  %270 = vmatpush2.bf16.msra.mxu0 0
  %271 = vmatprep.subr.bf16.mxu0 0
  %272 = vmatpush2.bf16.msra.mxu0 0
  %273 = vmatprep.subr.bf16.mxu0 0
  %274 = vmatpush2.bf16.msra.mxu0 0
  %275 = vmatprep.subr.bf16.mxu0 0
  %276 = vmatpush2.bf16.msra.mxu0 0
  %277 = vmatprep.subr.bf16.mxu0 0
  %278 = vmatpush2.bf16.msra.mxu0 0
  %279 = vmatprep.subr.bf16.mxu0 0
  %280 = vmatpush2.bf16.msra.mxu0 0
  %281 = vmatprep.mubr.bf16.mxu0 0
  %282 = vmatmul.mubr.bf16.gmra.mxu0 %v222
  %v283 = vpop.f32.mrf.mxu0
  %v284 = vadd.f32 %v218, %v283
  %v285 = vpop.f32.mrf.mxu0
  %v286 = vpop.f32.mrf.mxu0
  %v287 = vadd.f32 %v218, %v286
  %v288 = vpop.f32.mrf.mxu0
  %289 = vmatprep.mubr.bf16.mxu0 0
  %290 = vmatmul.mubr.bf16.gmra.mxu0 %v225
  %v291 = vpop.f32.mrf.mxu0
  %v292 = vadd.f32 %v218, %v291
  %v293 = vpop.f32.mrf.mxu0
  %v294 = vpop.f32.mrf.mxu0
  %v295 = vadd.f32 %v218, %v294
  %v296 = vpop.f32.mrf.mxu0
  %297 = vmatprep.mubr.bf16.mxu0 0
  %298 = vmatmul.mubr.bf16.gmra.mxu0 %v228
  %v299 = vpop.f32.mrf.mxu0
  %v300 = vadd.f32 %v218, %v299
  %v301 = vpop.f32.mrf.mxu0
  %v302 = vpop.f32.mrf.mxu0
  %v303 = vadd.f32 %v218, %v302
  %v304 = vpop.f32.mrf.mxu0
  %305 = vmatprep.mubr.bf16.mxu0 0
  %306 = vmatmul.mubr.bf16.gmra.mxu0 %v231
  %v307 = vpop.f32.mrf.mxu0
  %v308 = vadd.f32 %v218, %v307
  %v309 = vpop.f32.mrf.mxu0
  %v310 = vpop.f32.mrf.mxu0
  %v311 = vadd.f32 %v218, %v310
  %v312 = vpop.f32.mrf.mxu0
  %313 = vmatprep.mubr.bf16.mxu0 0
  %314 = vmatmul.mubr.bf16.gmra.mxu0 %v234
  %v315 = vpop.f32.mrf.mxu0
  %v316 = vadd.f32 %v218, %v315
  %v317 = vpop.f32.mrf.mxu0
  %v318 = vpop.f32.mrf.mxu0
  %v319 = vadd.f32 %v218, %v318
  %v320 = vpop.f32.mrf.mxu0
  %321 = vmatprep.mubr.bf16.mxu0 0
  %322 = vmatmul.mubr.bf16.gmra.mxu0 %v237
  %v323 = vpop.f32.mrf.mxu0
  %v324 = vadd.f32 %v218, %v323
  %v325 = vpop.f32.mrf.mxu0
  %v326 = vpop.f32.mrf.mxu0
  %v327 = vadd.f32 %v218, %v326
  %v328 = vpop.f32.mrf.mxu0
  %329 = vmatprep.mubr.bf16.mxu0 0
  %330 = vmatmul.mubr.bf16.gmra.mxu0 %v240
  %v331 = vpop.f32.mrf.mxu0
  %v332 = vadd.f32 %v218, %v331
  %v333 = vpop.f32.mrf.mxu0
  %v334 = vpop.f32.mrf.mxu0
  %v335 = vadd.f32 %v218, %v334
  %v336 = vpop.f32.mrf.mxu0
  %337 = vmatprep.mubr.bf16.mxu0 0
  %338 = vmatmul.mubr.bf16.gmra.mxu0 %v243
  %v339 = vpop.f32.mrf.mxu0
  %v340 = vadd.f32 %v218, %v339
  %v341 = vpop.f32.mrf.mxu0
  %v342 = vpop.f32.mrf.mxu0
  %v343 = vadd.f32 %v218, %v342
  %v344 = vpop.f32.mrf.mxu0
  %345 = vdwg.mxu0
  %v346 = vmax.f32 %v284, 0.0
  %v347 = vmax.f32 %v287, 0.0
  %v348 = vmax.f32 %v292, 0.0
  %v349 = vmax.f32 %v295, 0.0
  %v350 = vmax.f32 %v300, 0.0
  %v351 = vmax.f32 %v303, 0.0
  %v352 = vmax.f32 %v308, 0.0
  %v353 = vmax.f32 %v311, 0.0
  %v354 = vmax.f32 %v316, 0.0
  %v355 = vmax.f32 %v319, 0.0
  %v356 = vmax.f32 %v324, 0.0
  %v357 = vmax.f32 %v327, 0.0
  %v358 = vmax.f32 %v332, 0.0
  %v359 = vmax.f32 %v335, 0.0
  %v360 = vmax.f32 %v340, 0.0
  %v361 = vmax.f32 %v343, 0.0
  %362 = vst [vmem:[%s4] sm:$0xff] %v346
  %363 = vst [vmem:[%s4 + $0x8] sm:$0xff] %v347
  %364 = vst [vmem:[%s4 + $0x10] sm:$0xff] %v348
  %365 = vst [vmem:[%s4 + $0x18] sm:$0xff] %v349
  %366 = vst [vmem:[%s4 + $0x20] sm:$0xff] %v350
  %367 = vst [vmem:[%s4 + $0x28] sm:$0xff] %v351
  %368 = vst [vmem:[%s4 + $0x30] sm:$0xff] %v352
  %369 = vst [vmem:[%s4 + $0x38] sm:$0xff] %v353
  %370 = vst [vmem:[%s4 + $0x40] sm:$0xff] %v354
  %371 = vst [vmem:[%s4 + $0x48] sm:$0xff] %v355
  %372 = vst [vmem:[%s4 + $0x50] sm:$0xff] %v356
  %373 = vst [vmem:[%s4 + $0x58] sm:$0xff] %v357
  %374 = vst [vmem:[%s4 + $0x60] sm:$0xff] %v358
  %375 = vst [vmem:[%s4 + $0x68] sm:$0xff] %v359
  %376 = vst [vmem:[%s4 + $0x70] sm:$0xff] %v360
  %377 = vst [vmem:[%s4 + $0x78] sm:$0xff] %v361
  // Predicated region
  $region18: #{gcn_forward.3} parent=0 // pred_check
    _
  $region19: #{gcn_forward.3} parent=0 // pred_check_branch
    %379 = sbr.rel (0) target = $region21
  $region20: #{gcn_forward.3} parent=0 // pred_region
    _
  $region21: #{gcn_forward.3} parent=0 // pred_fallthru
    _
  // Predicated region
  $region22: #{gcn_forward.3} parent=0 // pred_check
    _
  $region23: #{gcn_forward.3} parent=0 // pred_check_branch
    %381 = sbr.rel (0) target = $region25
  $region24: #{gcn_forward.3} parent=0 // pred_region
    _
  $region25: #{gcn_forward.3} parent=0 // pred_fallthru
    _

// kernel: gcn_forward.5
$region0: #{gcn_forward.5}
  #allocation0 [shape = 'u32[]', space=smem, size = 0x4, offset = 0x4, fixed_abs, tag = 'smem constant byte address 0x4 - core index']
  #allocation1 [shape = 'u32[144,128]{1,0:T(1,128)}', space=vmem, size = 0x12000, scoped, tag = 'internal scratch']
  %s0 = inlined_call_operand.vmem [shape: bf16[128,128], index: 0, kind: input, shape index: {}]
  %s1 = inlined_call_operand.vmem [shape: f32[128,128], index: 1, kind: input, shape index: {}]
  %s2 = inlined_call_operand.vmem [shape: f32[128,128], index: 2, kind: input, shape index: {}]
  %s3 = inlined_call_operand.vmem [shape: f32[1,128], index: 3, kind: input, shape index: {}]
  %s4 = inlined_call_operand.vmem [shape: f32[128,128], index: 4, kind: input, shape index: {}]
  %s5 = inlined_call_operand.vmem [shape: f32[1,128], index: 5, kind: input, shape index: {}]
  %s6 = inlined_call_operand.vmem [shape: f32[128,128], index: 6, kind: output, shape index: {}]
  %s7 = sld [smem:[#allocation0]]
  $region34: #{gcn_forward.5} parent=0
    _
  %s9 = ssub.s32 1, %s7
  %s10 = scalar_select 0, %s9, %s7
  // Predicated region
  $region2: #{gcn_forward.5} parent=0 // pred_check
    _
  $region3: #{gcn_forward.5} parent=0 // pred_check_branch
    %12 = sbr.rel (0) target = $region5
  $region4: #{gcn_forward.5} parent=0 // pred_region
    _
  $region5: #{gcn_forward.5} parent=0 // pred_fallthru
    _
  // Predicated region
  $region6: #{gcn_forward.5} parent=0 // pred_check
    _
  $region7: #{gcn_forward.5} parent=0 // pred_check_branch
    %14 = sbr.rel (0) target = $region9
  $region8: #{gcn_forward.5} parent=0 // pred_region
    _
  $region9: #{gcn_forward.5} parent=0 // pred_fallthru
    _
  // Predicated region
  $region10: #{gcn_forward.5} parent=0 // pred_check
    _
  $region11: #{gcn_forward.5} parent=0 // pred_check_branch
    %16 = sbr.rel (0) target = $region13
  $region12: #{gcn_forward.5} parent=0 // pred_region
    _
  $region13: #{gcn_forward.5} parent=0 // pred_fallthru
    _
  // Predicated region
  $region14: #{gcn_forward.5} parent=0 // pred_check
    _
  $region15: #{gcn_forward.5} parent=0 // pred_check_branch
    %18 = sbr.rel (0) target = $region17
  $region16: #{gcn_forward.5} parent=0 // pred_region
    _
  $region17: #{gcn_forward.5} parent=0 // pred_fallthru
    _
  // Predicated region
  $region18: #{gcn_forward.5} parent=0 // pred_check
    _
  $region19: #{gcn_forward.5} parent=0 // pred_check_branch
    %20 = sbr.rel (0) target = $region21
  $region20: #{gcn_forward.5} parent=0 // pred_region
    _
  $region21: #{gcn_forward.5} parent=0 // pred_fallthru
    _
  // Predicated region
  $region22: #{gcn_forward.5} parent=0 // pred_check
    _
  $region23: #{gcn_forward.5} parent=0 // pred_check_branch
    %22 = sbr.rel (0) target = $region25
  $region24: #{gcn_forward.5} parent=0 // pred_region
    _
  $region25: #{gcn_forward.5} parent=0 // pred_fallthru
    _
  %v24 = vld [vmem:[%s0] sm:$0xf]
  %v25 = vld [vmem:[%s0 + $0x4] sm:$0xf]
  %v26 = vld [vmem:[%s0 + $0x8] sm:$0xf]
  %v27 = vld [vmem:[%s0 + $0xc] sm:$0xf]
  %v28 = vld [vmem:[%s0 + $0x10] sm:$0xf]
  %v29 = vld [vmem:[%s0 + $0x14] sm:$0xf]
  %v30 = vld [vmem:[%s0 + $0x18] sm:$0xf]
  %v31 = vld [vmem:[%s0 + $0x1c] sm:$0xf]
  %v32 = vld [vmem:[%s0 + $0x20] sm:$0xf]
  %v33 = vld [vmem:[%s0 + $0x24] sm:$0xf]
  %v34 = vld [vmem:[%s0 + $0x28] sm:$0xf]
  %v35 = vld [vmem:[%s0 + $0x2c] sm:$0xf]
  %v36 = vld [vmem:[%s0 + $0x30] sm:$0xf]
  %v37 = vld [vmem:[%s0 + $0x34] sm:$0xf]
  %v38 = vld [vmem:[%s0 + $0x38] sm:$0xf]
  %v39 = vld [vmem:[%s0 + $0x3c] sm:$0xf]
  %v40 = vld [vmem:[%s1] sm:$0xff]
  %v41 = vld [vmem:[%s1 + $0x8] sm:$0xff]
  %v42 = vld [vmem:[%s1 + $0x10] sm:$0xff]
  %v43 = vld [vmem:[%s1 + $0x18] sm:$0xff]
  %v44 = vld [vmem:[%s1 + $0x20] sm:$0xff]
  %v45 = vld [vmem:[%s1 + $0x28] sm:$0xff]
  %v46 = vld [vmem:[%s1 + $0x30] sm:$0xff]
  %v47 = vld [vmem:[%s1 + $0x38] sm:$0xff]
  %v48 = vld [vmem:[%s1 + $0x40] sm:$0xff]
  %v49 = vld [vmem:[%s1 + $0x48] sm:$0xff]
  %v50 = vld [vmem:[%s1 + $0x50] sm:$0xff]
  %v51 = vld [vmem:[%s1 + $0x58] sm:$0xff]
  %v52 = vld [vmem:[%s1 + $0x60] sm:$0xff]
  %v53 = vld [vmem:[%s1 + $0x68] sm:$0xff]
  %v54 = vld [vmem:[%s1 + $0x70] sm:$0xff]
  %v55 = vld [vmem:[%s1 + $0x78] sm:$0xff]
  %v56 = vpack.c.bf16 %v41, %v40
  %v57 = vpack.c.bf16 %v43, %v42
  %v58 = vpack.c.bf16 %v45, %v44
  %v59 = vpack.c.bf16 %v47, %v46
  %v60 = vpack.c.bf16 %v49, %v48
  %v61 = vpack.c.bf16 %v51, %v50
  %v62 = vpack.c.bf16 %v53, %v52
  %v63 = vpack.c.bf16 %v55, %v54
  %v80 = vunpack.c.l.b16 %v24
  %v81 = vunpack.c.l.b16 %v25
  %v82 = vunpack.c.l.b16 %v26
  %v83 = vunpack.c.l.b16 %v27
  %v84 = vunpack.c.l.b16 %v28
  %v85 = vunpack.c.l.b16 %v29
  %v86 = vunpack.c.l.b16 %v30
  %v87 = vunpack.c.l.b16 %v31
  %v88 = vunpack.c.l.b16 %v32
  %v89 = vunpack.c.l.b16 %v33
  %v90 = vunpack.c.l.b16 %v34
  %v91 = vunpack.c.l.b16 %v35
  %v92 = vunpack.c.l.b16 %v36
  %v93 = vunpack.c.l.b16 %v37
  %v94 = vunpack.c.l.b16 %v38
  %v95 = vunpack.c.l.b16 %v39
  %v96 = vpack.c.b16 %v81, %v80
  %v97 = vpack.c.b16 %v83, %v82
  %v98 = vpack.c.b16 %v85, %v84
  %v99 = vpack.c.b16 %v87, %v86
  %v100 = vpack.c.b16 %v89, %v88
  %v101 = vpack.c.b16 %v91, %v90
  %v102 = vpack.c.b16 %v93, %v92
  %v103 = vpack.c.b16 %v95, %v94
  %112 = vmatprep.subr.bf16.mxu0 0
  %113 = vmatpush1.bf16.msra.mxu0 %v63
  %114 = vmatprep.subr.bf16.mxu0 0
  %115 = vmatpush1.bf16.msra.mxu0 %v62
  %116 = vmatprep.subr.bf16.mxu0 0
  %117 = vmatpush1.bf16.msra.mxu0 %v61
  %118 = vmatprep.subr.bf16.mxu0 0
  %119 = vmatpush1.bf16.msra.mxu0 %v60
  %120 = vmatprep.subr.bf16.mxu0 0
  %121 = vmatpush1.bf16.msra.mxu0 %v59
  %122 = vmatprep.subr.bf16.mxu0 0
  %123 = vmatpush1.bf16.msra.mxu0 %v58
  %124 = vmatprep.subr.bf16.mxu0 0
  %125 = vmatpush1.bf16.msra.mxu0 %v57
  %126 = vmatprep.subr.bf16.mxu0 0
  %127 = vmatpush1.bf16.msra.mxu0 %v56
  %128 = vmatprep.subr.bf16.mxu0 0
  %129 = vmatpush2.bf16.msra.mxu0 0
  %130 = vmatprep.subr.bf16.mxu0 0
  %131 = vmatpush2.bf16.msra.mxu0 0
  %132 = vmatprep.subr.bf16.mxu0 0
  %133 = vmatpush2.bf16.msra.mxu0 0
  %134 = vmatprep.subr.bf16.mxu0 0
  %135 = vmatpush2.bf16.msra.mxu0 0
  %136 = vmatprep.subr.bf16.mxu0 0
  %137 = vmatpush2.bf16.msra.mxu0 0
  %138 = vmatprep.subr.bf16.mxu0 0
  %139 = vmatpush2.bf16.msra.mxu0 0
  %140 = vmatprep.subr.bf16.mxu0 0
  %141 = vmatpush2.bf16.msra.mxu0 0
  %142 = vmatprep.subr.bf16.mxu0 0
  %143 = vmatpush2.bf16.msra.mxu0 0
  %144 = vmatprep.mubr.bf16.mxu0 0
  %145 = vmatmul.mubr.bf16.gmra.mxu0 %v96
  %v146 = vpop.f32.mrf.mxu0
  %v147 = vadd.f32 0.0, %v146
  %v148 = vpop.f32.mrf.mxu0
  %v149 = vpop.f32.mrf.mxu0
  %v150 = vadd.f32 0.0, %v149
  %v151 = vpop.f32.mrf.mxu0
  %152 = vmatprep.mubr.bf16.mxu0 0
  %153 = vmatmul.mubr.bf16.gmra.mxu0 %v97
  %v154 = vpop.f32.mrf.mxu0
  %v155 = vadd.f32 0.0, %v154
  %v156 = vpop.f32.mrf.mxu0
  %v157 = vpop.f32.mrf.mxu0
  %v158 = vadd.f32 0.0, %v157
  %v159 = vpop.f32.mrf.mxu0
  %160 = vmatprep.mubr.bf16.mxu0 0
  %161 = vmatmul.mubr.bf16.gmra.mxu0 %v98
  %v162 = vpop.f32.mrf.mxu0
  %v163 = vadd.f32 0.0, %v162
  %v164 = vpop.f32.mrf.mxu0
  %v165 = vpop.f32.mrf.mxu0
  %v166 = vadd.f32 0.0, %v165
  %v167 = vpop.f32.mrf.mxu0
  %168 = vmatprep.mubr.bf16.mxu0 0
  %169 = vmatmul.mubr.bf16.gmra.mxu0 %v99
  %v170 = vpop.f32.mrf.mxu0
  %v171 = vadd.f32 0.0, %v170
  %v172 = vpop.f32.mrf.mxu0
  %v173 = vpop.f32.mrf.mxu0
  %v174 = vadd.f32 0.0, %v173
  %v175 = vpop.f32.mrf.mxu0
  %176 = vmatprep.mubr.bf16.mxu0 0
  %177 = vmatmul.mubr.bf16.gmra.mxu0 %v100
  %v178 = vpop.f32.mrf.mxu0
  %v179 = vadd.f32 0.0, %v178
  %v180 = vpop.f32.mrf.mxu0
  %v181 = vpop.f32.mrf.mxu0
  %v182 = vadd.f32 0.0, %v181
  %v183 = vpop.f32.mrf.mxu0
  %184 = vmatprep.mubr.bf16.mxu0 0
  %185 = vmatmul.mubr.bf16.gmra.mxu0 %v101
  %v186 = vpop.f32.mrf.mxu0
  %v187 = vadd.f32 0.0, %v186
  %v188 = vpop.f32.mrf.mxu0
  %v189 = vpop.f32.mrf.mxu0
  %v190 = vadd.f32 0.0, %v189
  %v191 = vpop.f32.mrf.mxu0
  %192 = vmatprep.mubr.bf16.mxu0 0
  %193 = vmatmul.mubr.bf16.gmra.mxu0 %v102
  %v194 = vpop.f32.mrf.mxu0
  %v195 = vadd.f32 0.0, %v194
  %v196 = vpop.f32.mrf.mxu0
  %v197 = vpop.f32.mrf.mxu0
  %v198 = vadd.f32 0.0, %v197
  %v199 = vpop.f32.mrf.mxu0
  %200 = vmatprep.mubr.bf16.mxu0 0
  %201 = vmatmul.mubr.bf16.gmra.mxu0 %v103
  %v202 = vpop.f32.mrf.mxu0
  %v203 = vadd.f32 0.0, %v202
  %v204 = vpop.f32.mrf.mxu0
  %v205 = vpop.f32.mrf.mxu0
  %v206 = vadd.f32 0.0, %v205
  %v207 = vpop.f32.mrf.mxu0
  %208 = vdwg.mxu0
  %v209 = vpack.c.bf16 %v150, %v147
  %v210 = vpack.c.bf16 %v158, %v155
  %v211 = vpack.c.bf16 %v166, %v163
  %v212 = vpack.c.bf16 %v174, %v171
  %v213 = vpack.c.bf16 %v182, %v179
  %v214 = vpack.c.bf16 %v190, %v187
  %v215 = vpack.c.bf16 %v198, %v195
  %v216 = vpack.c.bf16 %v206, %v203
  %v217 = vld [vmem:[%s2] sm:$0xff]
  %v218 = vld [vmem:[%s2 + $0x8] sm:$0xff]
  %v219 = vld [vmem:[%s2 + $0x10] sm:$0xff]
  %v220 = vld [vmem:[%s2 + $0x18] sm:$0xff]
  %v221 = vld [vmem:[%s2 + $0x20] sm:$0xff]
  %v222 = vld [vmem:[%s2 + $0x28] sm:$0xff]
  %v223 = vld [vmem:[%s2 + $0x30] sm:$0xff]
  %v224 = vld [vmem:[%s2 + $0x38] sm:$0xff]
  %v225 = vld [vmem:[%s2 + $0x40] sm:$0xff]
  %v226 = vld [vmem:[%s2 + $0x48] sm:$0xff]
  %v227 = vld [vmem:[%s2 + $0x50] sm:$0xff]
  %v228 = vld [vmem:[%s2 + $0x58] sm:$0xff]
  %v229 = vld [vmem:[%s2 + $0x60] sm:$0xff]
  %v230 = vld [vmem:[%s2 + $0x68] sm:$0xff]
  %v231 = vld [vmem:[%s2 + $0x70] sm:$0xff]
  %v232 = vld [vmem:[%s2 + $0x78] sm:$0xff]
  %v233 = vpack.c.bf16 %v218, %v217
  %v234 = vpack.c.bf16 %v220, %v219
  %v235 = vpack.c.bf16 %v222, %v221
  %v236 = vpack.c.bf16 %v224, %v223
  %v237 = vpack.c.bf16 %v226, %v225
  %v238 = vpack.c.bf16 %v228, %v227
  %v239 = vpack.c.bf16 %v230, %v229
  %v240 = vpack.c.bf16 %v232, %v231
  %v241 = vld [vmem:[%s3] sm:$0x1]
  %v243 = vlaneseq
  %v244 = vshrl.u32 %v243, 7
  %v245 = vsub.s32 0, %v244
  %v246 = vrot.slane %v241, %v245
  %248 = vmatprep.subr.bf16.mxu0 0
  %249 = vmatpush1.bf16.msra.mxu0 %v240
  %250 = vmatprep.subr.bf16.mxu0 0
  %251 = vmatpush1.bf16.msra.mxu0 %v239
  %252 = vmatprep.subr.bf16.mxu0 0
  %253 = vmatpush1.bf16.msra.mxu0 %v238
  %254 = vmatprep.subr.bf16.mxu0 0
  %255 = vmatpush1.bf16.msra.mxu0 %v237
  %256 = vmatprep.subr.bf16.mxu0 0
  %257 = vmatpush1.bf16.msra.mxu0 %v236
  %258 = vmatprep.subr.bf16.mxu0 0
  %259 = vmatpush1.bf16.msra.mxu0 %v235
  %260 = vmatprep.subr.bf16.mxu0 0
  %261 = vmatpush1.bf16.msra.mxu0 %v234
  %262 = vmatprep.subr.bf16.mxu0 0
  %263 = vmatpush1.bf16.msra.mxu0 %v233
  %264 = vmatprep.subr.bf16.mxu0 0
  %265 = vmatpush2.bf16.msra.mxu0 0
  %266 = vmatprep.subr.bf16.mxu0 0
  %267 = vmatpush2.bf16.msra.mxu0 0
  %268 = vmatprep.subr.bf16.mxu0 0
  %269 = vmatpush2.bf16.msra.mxu0 0
  %270 = vmatprep.subr.bf16.mxu0 0
  %271 = vmatpush2.bf16.msra.mxu0 0
  %272 = vmatprep.subr.bf16.mxu0 0
  %273 = vmatpush2.bf16.msra.mxu0 0
  %274 = vmatprep.subr.bf16.mxu0 0
  %275 = vmatpush2.bf16.msra.mxu0 0
  %276 = vmatprep.subr.bf16.mxu0 0
  %277 = vmatpush2.bf16.msra.mxu0 0
  %278 = vmatprep.subr.bf16.mxu0 0
  %279 = vmatpush2.bf16.msra.mxu0 0
  %280 = vmatprep.mubr.bf16.mxu0 0
  %281 = vmatmul.mubr.bf16.gmra.mxu0 %v209
  %v282 = vpop.f32.mrf.mxu0
  %v283 = vadd.f32 %v246, %v282
  %v284 = vpop.f32.mrf.mxu0
  %v285 = vpop.f32.mrf.mxu0
  %v286 = vadd.f32 %v246, %v285
  %v287 = vpop.f32.mrf.mxu0
  %288 = vmatprep.mubr.bf16.mxu0 0
  %289 = vmatmul.mubr.bf16.gmra.mxu0 %v210
  %v290 = vpop.f32.mrf.mxu0
  %v291 = vadd.f32 %v246, %v290
  %v292 = vpop.f32.mrf.mxu0
  %v293 = vpop.f32.mrf.mxu0
  %v294 = vadd.f32 %v246, %v293
  %v295 = vpop.f32.mrf.mxu0
  %296 = vmatprep.mubr.bf16.mxu0 0
  %297 = vmatmul.mubr.bf16.gmra.mxu0 %v211
  %v298 = vpop.f32.mrf.mxu0
  %v299 = vadd.f32 %v246, %v298
  %v300 = vpop.f32.mrf.mxu0
  %v301 = vpop.f32.mrf.mxu0
  %v302 = vadd.f32 %v246, %v301
  %v303 = vpop.f32.mrf.mxu0
  %304 = vmatprep.mubr.bf16.mxu0 0
  %305 = vmatmul.mubr.bf16.gmra.mxu0 %v212
  %v306 = vpop.f32.mrf.mxu0
  %v307 = vadd.f32 %v246, %v306
  %v308 = vpop.f32.mrf.mxu0
  %v309 = vpop.f32.mrf.mxu0
  %v310 = vadd.f32 %v246, %v309
  %v311 = vpop.f32.mrf.mxu0
  %312 = vmatprep.mubr.bf16.mxu0 0
  %313 = vmatmul.mubr.bf16.gmra.mxu0 %v213
  %v314 = vpop.f32.mrf.mxu0
  %v315 = vadd.f32 %v246, %v314
  %v316 = vpop.f32.mrf.mxu0
  %v317 = vpop.f32.mrf.mxu0
  %v318 = vadd.f32 %v246, %v317
  %v319 = vpop.f32.mrf.mxu0
  %320 = vmatprep.mubr.bf16.mxu0 0
  %321 = vmatmul.mubr.bf16.gmra.mxu0 %v214
  %v322 = vpop.f32.mrf.mxu0
  %v323 = vadd.f32 %v246, %v322
  %v324 = vpop.f32.mrf.mxu0
  %v325 = vpop.f32.mrf.mxu0
  %v326 = vadd.f32 %v246, %v325
  %v327 = vpop.f32.mrf.mxu0
  %328 = vmatprep.mubr.bf16.mxu0 0
  %329 = vmatmul.mubr.bf16.gmra.mxu0 %v215
  %v330 = vpop.f32.mrf.mxu0
  %v331 = vadd.f32 %v246, %v330
  %v332 = vpop.f32.mrf.mxu0
  %v333 = vpop.f32.mrf.mxu0
  %v334 = vadd.f32 %v246, %v333
  %v335 = vpop.f32.mrf.mxu0
  %336 = vmatprep.mubr.bf16.mxu0 0
  %337 = vmatmul.mubr.bf16.gmra.mxu0 %v216
  %v338 = vpop.f32.mrf.mxu0
  %v339 = vadd.f32 %v246, %v338
  %v340 = vpop.f32.mrf.mxu0
  %v341 = vpop.f32.mrf.mxu0
  %v342 = vadd.f32 %v246, %v341
  %v343 = vpop.f32.mrf.mxu0
  %344 = vdwg.mxu0
  %v345 = vmax.f32 %v283, 0.0
  %v346 = vmax.f32 %v286, 0.0
  %v347 = vmax.f32 %v291, 0.0
  %v348 = vmax.f32 %v294, 0.0
  %v349 = vmax.f32 %v299, 0.0
  %v350 = vmax.f32 %v302, 0.0
  %v351 = vmax.f32 %v307, 0.0
  %v352 = vmax.f32 %v310, 0.0
  %v353 = vmax.f32 %v315, 0.0
  %v354 = vmax.f32 %v318, 0.0
  %v355 = vmax.f32 %v323, 0.0
  %v356 = vmax.f32 %v326, 0.0
  %v357 = vmax.f32 %v331, 0.0
  %v358 = vmax.f32 %v334, 0.0
  %v359 = vmax.f32 %v339, 0.0
  %v360 = vmax.f32 %v342, 0.0
  %v361 = vpack.c.bf16 %v346, %v345
  %v362 = vpack.c.bf16 %v348, %v347
  %v363 = vpack.c.bf16 %v350, %v349
  %v364 = vpack.c.bf16 %v352, %v351
  %v365 = vpack.c.bf16 %v354, %v353
  %v366 = vpack.c.bf16 %v356, %v355
  %v367 = vpack.c.bf16 %v358, %v357
  %v368 = vpack.c.bf16 %v360, %v359
  %v369 = vld [vmem:[%s4] sm:$0xff]
  %v370 = vld [vmem:[%s4 + $0x8] sm:$0xff]
  %v371 = vld [vmem:[%s4 + $0x10] sm:$0xff]
  %v372 = vld [vmem:[%s4 + $0x18] sm:$0xff]
  %v373 = vld [vmem:[%s4 + $0x20] sm:$0xff]
  %v374 = vld [vmem:[%s4 + $0x28] sm:$0xff]
  %v375 = vld [vmem:[%s4 + $0x30] sm:$0xff]
  %v376 = vld [vmem:[%s4 + $0x38] sm:$0xff]
  %v377 = vld [vmem:[%s4 + $0x40] sm:$0xff]
  %v378 = vld [vmem:[%s4 + $0x48] sm:$0xff]
  %v379 = vld [vmem:[%s4 + $0x50] sm:$0xff]
  %v380 = vld [vmem:[%s4 + $0x58] sm:$0xff]
  %v381 = vld [vmem:[%s4 + $0x60] sm:$0xff]
  %v382 = vld [vmem:[%s4 + $0x68] sm:$0xff]
  %v383 = vld [vmem:[%s4 + $0x70] sm:$0xff]
  %v384 = vld [vmem:[%s4 + $0x78] sm:$0xff]
  %v385 = vpack.c.bf16 %v370, %v369
  %v386 = vpack.c.bf16 %v372, %v371
  %v387 = vpack.c.bf16 %v374, %v373
  %v388 = vpack.c.bf16 %v376, %v375
  %v389 = vpack.c.bf16 %v378, %v377
  %v390 = vpack.c.bf16 %v380, %v379
  %v391 = vpack.c.bf16 %v382, %v381
  %v392 = vpack.c.bf16 %v384, %v383
  %v393 = vld [vmem:[%s5] sm:$0x1]
  %v395 = vlaneseq
  %v396 = vshrl.u32 %v395, 7
  %v397 = vsub.s32 0, %v396
  %v398 = vrot.slane %v393, %v397
  %400 = vmatprep.subr.bf16.mxu0 0
  %401 = vmatpush1.bf16.msra.mxu0 %v392
  %402 = vmatprep.subr.bf16.mxu0 0
  %403 = vmatpush1.bf16.msra.mxu0 %v391
  %404 = vmatprep.subr.bf16.mxu0 0
  %405 = vmatpush1.bf16.msra.mxu0 %v390
  %406 = vmatprep.subr.bf16.mxu0 0
  %407 = vmatpush1.bf16.msra.mxu0 %v389
  %408 = vmatprep.subr.bf16.mxu0 0
  %409 = vmatpush1.bf16.msra.mxu0 %v388
  %410 = vmatprep.subr.bf16.mxu0 0
  %411 = vmatpush1.bf16.msra.mxu0 %v387
  %412 = vmatprep.subr.bf16.mxu0 0
  %413 = vmatpush1.bf16.msra.mxu0 %v386
  %414 = vmatprep.subr.bf16.mxu0 0
  %415 = vmatpush1.bf16.msra.mxu0 %v385
  %416 = vmatprep.subr.bf16.mxu0 0
  %417 = vmatpush2.bf16.msra.mxu0 0
  %418 = vmatprep.subr.bf16.mxu0 0
  %419 = vmatpush2.bf16.msra.mxu0 0
  %420 = vmatprep.subr.bf16.mxu0 0
  %421 = vmatpush2.bf16.msra.mxu0 0
  %422 = vmatprep.subr.bf16.mxu0 0
  %423 = vmatpush2.bf16.msra.mxu0 0
  %424 = vmatprep.subr.bf16.mxu0 0
  %425 = vmatpush2.bf16.msra.mxu0 0
  %426 = vmatprep.subr.bf16.mxu0 0
  %427 = vmatpush2.bf16.msra.mxu0 0
  %428 = vmatprep.subr.bf16.mxu0 0
  %429 = vmatpush2.bf16.msra.mxu0 0
  %430 = vmatprep.subr.bf16.mxu0 0
  %431 = vmatpush2.bf16.msra.mxu0 0
  %432 = vmatprep.mubr.bf16.mxu0 0
  %433 = vmatmul.mubr.bf16.gmra.mxu0 %v361
  %v434 = vpop.f32.mrf.mxu0
  %v435 = vadd.f32 %v398, %v434
  %v436 = vpop.f32.mrf.mxu0
  %v437 = vpop.f32.mrf.mxu0
  %v438 = vadd.f32 %v398, %v437
  %v439 = vpop.f32.mrf.mxu0
  %440 = vmatprep.mubr.bf16.mxu0 0
  %441 = vmatmul.mubr.bf16.gmra.mxu0 %v362
  %v442 = vpop.f32.mrf.mxu0
  %v443 = vadd.f32 %v398, %v442
  %v444 = vpop.f32.mrf.mxu0
  %v445 = vpop.f32.mrf.mxu0
  %v446 = vadd.f32 %v398, %v445
  %v447 = vpop.f32.mrf.mxu0
  %448 = vmatprep.mubr.bf16.mxu0 0
  %449 = vmatmul.mubr.bf16.gmra.mxu0 %v363
  %v450 = vpop.f32.mrf.mxu0
  %v451 = vadd.f32 %v398, %v450
  %v452 = vpop.f32.mrf.mxu0
  %v453 = vpop.f32.mrf.mxu0
  %v454 = vadd.f32 %v398, %v453
  %v455 = vpop.f32.mrf.mxu0
  %456 = vmatprep.mubr.bf16.mxu0 0
  %457 = vmatmul.mubr.bf16.gmra.mxu0 %v364
  %v458 = vpop.f32.mrf.mxu0
  %v459 = vadd.f32 %v398, %v458
  %v460 = vpop.f32.mrf.mxu0
  %v461 = vpop.f32.mrf.mxu0
  %v462 = vadd.f32 %v398, %v461
  %v463 = vpop.f32.mrf.mxu0
  %464 = vmatprep.mubr.bf16.mxu0 0
  %465 = vmatmul.mubr.bf16.gmra.mxu0 %v365
  %v466 = vpop.f32.mrf.mxu0
  %v467 = vadd.f32 %v398, %v466
  %v468 = vpop.f32.mrf.mxu0
  %v469 = vpop.f32.mrf.mxu0
  %v470 = vadd.f32 %v398, %v469
  %v471 = vpop.f32.mrf.mxu0
  %472 = vmatprep.mubr.bf16.mxu0 0
  %473 = vmatmul.mubr.bf16.gmra.mxu0 %v366
  %v474 = vpop.f32.mrf.mxu0
  %v475 = vadd.f32 %v398, %v474
  %v476 = vpop.f32.mrf.mxu0
  %v477 = vpop.f32.mrf.mxu0
  %v478 = vadd.f32 %v398, %v477
  %v479 = vpop.f32.mrf.mxu0
  %480 = vmatprep.mubr.bf16.mxu0 0
  %481 = vmatmul.mubr.bf16.gmra.mxu0 %v367
  %v482 = vpop.f32.mrf.mxu0
  %v483 = vadd.f32 %v398, %v482
  %v484 = vpop.f32.mrf.mxu0
  %v485 = vpop.f32.mrf.mxu0
  %v486 = vadd.f32 %v398, %v485
  %v487 = vpop.f32.mrf.mxu0
  %488 = vmatprep.mubr.bf16.mxu0 0
  %489 = vmatmul.mubr.bf16.gmra.mxu0 %v368
  %v490 = vpop.f32.mrf.mxu0
  %v491 = vadd.f32 %v398, %v490
  %v492 = vpop.f32.mrf.mxu0
  %v493 = vpop.f32.mrf.mxu0
  %v494 = vadd.f32 %v398, %v493
  %v495 = vpop.f32.mrf.mxu0
  %496 = vdwg.mxu0
  %497 = vst [vmem:[%s6] sm:$0xff] %v435
  %498 = vst [vmem:[%s6 + $0x8] sm:$0xff] %v438
  %499 = vst [vmem:[%s6 + $0x10] sm:$0xff] %v443
  %500 = vst [vmem:[%s6 + $0x18] sm:$0xff] %v446
  %501 = vst [vmem:[%s6 + $0x20] sm:$0xff] %v451
  %502 = vst [vmem:[%s6 + $0x28] sm:$0xff] %v454
  %503 = vst [vmem:[%s6 + $0x30] sm:$0xff] %v459
  %504 = vst [vmem:[%s6 + $0x38] sm:$0xff] %v462
  %505 = vst [vmem:[%s6 + $0x40] sm:$0xff] %v467
  %506 = vst [vmem:[%s6 + $0x48] sm:$0xff] %v470
  %507 = vst [vmem:[%s6 + $0x50] sm:$0xff] %v475
  %508 = vst [vmem:[%s6 + $0x58] sm:$0xff] %v478
  %509 = vst [vmem:[%s6 + $0x60] sm:$0xff] %v483
  %510 = vst [vmem:[%s6 + $0x68] sm:$0xff] %v486
  %511 = vst [vmem:[%s6 + $0x70] sm:$0xff] %v491
  %512 = vst [vmem:[%s6 + $0x78] sm:$0xff] %v494
  // Predicated region
  $region26: #{gcn_forward.5} parent=0 // pred_check
    _
  $region27: #{gcn_forward.5} parent=0 // pred_check_branch
    %514 = sbr.rel (0) target = $region29
  $region28: #{gcn_forward.5} parent=0 // pred_region
    _
  $region29: #{gcn_forward.5} parent=0 // pred_fallthru
    _
  // Predicated region
  $region30: #{gcn_forward.5} parent=0 // pred_check
    _
  $region31: #{gcn_forward.5} parent=0 // pred_check_branch
    %516 = sbr.rel (0) target = $region33
  $region32: #{gcn_forward.5} parent=0 // pred_region
    _
  $region33: #{gcn_forward.5} parent=0 // pred_fallthru
    _

</llo_original>
